<compile_context>
chip_gen: v5e
topology: v5e:2x2
jax: 0.10.0
libtpu: 0.0.40
codegen_flags: <defaults>
</compile_context>

<pallas_src>
import jax
import jax.numpy as jnp
from jax.experimental import pallas as pl
from jax.experimental.pallas import tpu as pltpu


# ----------------------------- in-kernel math helpers -----------------------------

def _erf(x):
    # Abramowitz & Stegun 7.1.26 rational approximation (|err| < 1.5e-7): built only
    # from ops with guaranteed Mosaic lowerings (abs/exp/mul/add/where).
    p = 0.3275911
    a1, a2, a3, a4, a5 = (0.254829592, -0.284496736, 1.421413741,
                          -1.453152027, 1.061405429)
    ax = jnp.abs(x)
    t = 1.0 / (1.0 + p * ax)
    poly = ((((a5 * t + a4) * t + a3) * t + a2) * t + a1) * t
    y = 1.0 - poly * jnp.exp(-(ax * ax))
    return jnp.where(x < 0, -y, y)


def _gelu(x):
    # Exact (erf-based) GELU, matching torch.nn.GELU() / F.gelu defaults.
    return 0.5 * x * (1.0 + _erf(x * 0.7071067811865476))


def _silu(x):
    return x * (1.0 / (1.0 + jnp.exp(-x)))


def _conv3(h, w_ref):
    """1-D conv, kernel=3, padding=1, no bias.  h: (C_in, L); w_ref: (3, C_out, C_in)."""
    c_in, length = h.shape
    z = jnp.zeros((c_in, 1), h.dtype)
    hp = jnp.concatenate([z, h, z], axis=1)                                  # (C_in, L+2)
    acc = jnp.dot(w_ref[0], hp[:, 0:length], preferred_element_type=jnp.float32)
    acc = acc + jnp.dot(w_ref[1], hp[:, 1:length + 1], preferred_element_type=jnp.float32)
    acc = acc + jnp.dot(w_ref[2], hp[:, 2:length + 2], preferred_element_type=jnp.float32)
    return acc                                                               # (C_out, L)


def _groupnorm1(h, gamma_ref, beta_ref, eps=1e-5):
    """GroupNorm(num_groups=1, C): normalize over all of (C, L), per-channel affine."""
    n = h.shape[0] * h.shape[1]
    s = jnp.sum(h, axis=1, keepdims=True)
    s = jnp.sum(s, axis=0, keepdims=True)                                    # (1, 1)
    mean = s * (1.0 / n)
    d = h - mean
    v = jnp.sum(d * d, axis=1, keepdims=True)
    v = jnp.sum(v, axis=0, keepdims=True)                                    # (1, 1)
    inv = jax.lax.rsqrt(v * (1.0 / n) + eps)
    return d * inv * gamma_ref[...] + beta_ref[...]


# ----------------------------------- the kernel ------------------------------------

def _up_kernel(up_ref, x_ref, skip_ref, t_ref,
               w1a_ref, g1a_ref, b1a_ref,
               w1b_ref, g1b_ref, b1b_ref,
               w2a_ref, g2a_ref, b2a_ref,
               w2b_ref, g2b_ref, b2b_ref,
               we_ref, be_ref,
               o_ref):
    # nn.Upsample(scale_factor=2, mode='linear', align_corners=True) as a matmul.
    x_up = jnp.dot(x_ref[...], up_ref[...], preferred_element_type=jnp.float32)  # (C_x, 2L)

    # torch.cat([skip_x, x], dim=1)
    h0 = jnp.concatenate([skip_ref[...], x_up], axis=0)                          # (C_in, 2L)

    # DoubleConv #1 (residual=True): gelu(x + GN(conv(GELU(GN(conv(x))))))
    h = _conv3(h0, w1a_ref)
    h = _gelu(_groupnorm1(h, g1a_ref, b1a_ref))
    h = _conv3(h, w1b_ref)
    h = _groupnorm1(h, g1b_ref, b1b_ref)
    h1 = _gelu(h0 + h)                                                           # (C_in, 2L)

    # DoubleConv #2 (mid = C_in // 2), no residual
    h = _conv3(h1, w2a_ref)
    h = _gelu(_groupnorm1(h, g2a_ref, b2a_ref))
    h = _conv3(h, w2b_ref)
    h2 = _groupnorm1(h, g2b_ref, b2b_ref)                                        # (C_out, 2L)
    # TODO(synk): nn.Dropout(p=0.05) is eval-mode identity here; train-mode would use pltpu.prng_*.

    # emb_layer: SiLU -> Linear(emb_dim, C_out); broadcast over length and add.
    emb = jnp.dot(we_ref[...], _silu(t_ref[...]),
                  preferred_element_type=jnp.float32) + be_ref[...]              # (C_out, 1)

    o_ref[...] = (h2 + emb).astype(o_ref.dtype)


# ------------------------------------ wrapper ---------------------------------------

def _upsample_matrix(l_in, l_out):
    """(l_in, l_out) matrix encoding linear interpolation with align_corners=True."""
    if l_in == 1:
        return jnp.ones((1, l_out), jnp.float32)
    pos = jnp.arange(l_out, dtype=jnp.float32) * ((l_in - 1) / (l_out - 1))
    lo = jnp.clip(jnp.floor(pos).astype(jnp.int32), 0, l_in - 2)
    frac = pos - lo.astype(jnp.float32)
    rows = jnp.arange(l_in, dtype=jnp.int32)[:, None]
    u = (jnp.where(rows == lo[None, :], 1.0 - frac[None, :], 0.0)
         + jnp.where(rows == (lo + 1)[None, :], frac[None, :], 0.0))
    return u.astype(jnp.float32)


def up_forward(x, skip_x, t, params):
    """x: (B, C_x, L), skip_x: (B, C_skip, 2L), t: (B, emb_dim) -> (B, C_out, 2L)."""
    B, c_x, L = x.shape
    _, c_skip, L2 = skip_x.shape
    assert L2 == 2 * L, (L, L2)
    emb_dim = t.shape[1]
    c_out = params["we"].shape[0]

    up_mat = _upsample_matrix(L, L2)
    t3 = t[:, :, None]                                   # (B, emb_dim, 1)

    def fixed(shape):                                    # weights: DMA once, VMEM-resident
        return pl.BlockSpec(shape, lambda b, _n=len(shape): (0,) * _n)

    def batched(shape):                                  # per-sample blocks along grid
        return pl.BlockSpec((None,) + shape, lambda b, _n=len(shape): (b,) + (0,) * _n)

    in_specs = [
        fixed(up_mat.shape),
        batched((c_x, L)),
        batched((c_skip, L2)),
        batched((emb_dim, 1)),
        fixed(params["w1a"].shape), fixed(params["g1a"].shape), fixed(params["b1a"].shape),
        fixed(params["w1b"].shape), fixed(params["g1b"].shape), fixed(params["b1b"].shape),
        fixed(params["w2a"].shape), fixed(params["g2a"].shape), fixed(params["b2a"].shape),
        fixed(params["w2b"].shape), fixed(params["g2b"].shape), fixed(params["b2b"].shape),
        fixed(params["we"].shape), fixed(params["be"].shape),
    ]

    return pl.pallas_call(
        _up_kernel,
        out_shape=jax.ShapeDtypeStruct((B, c_out, L2), jnp.float32),
        grid_spec=pltpu.PrefetchScalarGridSpec(
            num_scalar_prefetch=0,
            grid=(B,),
            in_specs=in_specs,
            out_specs=batched((c_out, L2)),
        ),
        compiler_params=pltpu.CompilerParams(
            dimension_semantics=("parallel",)),
    )(up_mat, x, skip_x, t3,
      params["w1a"], params["g1a"], params["b1a"],
      params["w1b"], params["g1b"], params["b1b"],
      params["w2a"], params["g2a"], params["b2a"],
      params["w2b"], params["g2b"], params["b2b"],
      params["we"], params["be"])


# ------------------------------- params & reference ---------------------------------

def init_params(key, in_channels, out_channels, emb_dim):
    """Deterministic init.  Conv weights stored as (3, C_out, C_in): w[k] = torch W[:, :, k]."""
    mid = in_channels // 2
    ks = jax.random.split(key, 6)

    def conv_w(k, c_out, c_in):
        bound = 1.0 / (c_in * 3) ** 0.5
        return jax.random.uniform(k, (3, c_out, c_in), jnp.float32, -bound, bound)

    def gn(c):
        return jnp.ones((c, 1), jnp.float32), jnp.zeros((c, 1), jnp.float32)

    g1a, b1a = gn(in_channels)
    g1b, b1b = gn(in_channels)
    g2a, b2a = gn(mid)
    g2b, b2b = gn(out_channels)

    bound_e = 1.0 / emb_dim ** 0.5
    we = jax.random.uniform(ks[4], (out_channels, emb_dim), jnp.float32, -bound_e, bound_e)
    be = jax.random.uniform(ks[5], (out_channels, 1), jnp.float32, -bound_e, bound_e)

    return {
        "w1a": conv_w(ks[0], in_channels, in_channels), "g1a": g1a, "b1a": b1a,
        "w1b": conv_w(ks[1], in_channels, in_channels), "g1b": g1b, "b1b": b1b,
        "w2a": conv_w(ks[2], mid, in_channels),         "g2a": g2a, "b2a": b2a,
        "w2b": conv_w(ks[3], out_channels, mid),        "g2b": g2b, "b2b": b2b,
        "we": we, "be": be,
    }


def _reference(x, skip_x, t, params):
    """Pure-JAX reference of the same math (exact erf GELU)."""
    B, c_x, L = x.shape
    L2 = 2 * L
    up = _upsample_matrix(L, L2)
    x_up = jnp.einsum("bcl,lm->bcm", x, up)
    h0 = jnp.concatenate([skip_x, x_up], axis=1)

    def conv3(h, w):
        hp = jnp.pad(h, ((0, 0), (0, 0), (1, 1)))
        return (jnp.einsum("oc,bcl->bol", w[0], hp[:, :, 0:L2])
                + jnp.einsum("oc,bcl->bol", w[1], hp[:, :, 1:L2 + 1])
                + jnp.einsum("oc,bcl->bol", w[2], hp[:, :, 2:L2 + 2]))

    def gn(h, g, b, eps=1e-5):
        mean = jnp.mean(h, axis=(1, 2), keepdims=True)
        var = jnp.mean((h - mean) ** 2, axis=(1, 2), keepdims=True)
        return (h - mean) * jax.lax.rsqrt(var + eps) * g[None] + b[None]

    def gelu(v):
        return 0.5 * v * (1.0 + jax.scipy.special.erf(v / jnp.sqrt(2.0)))

    h = conv3(h0, params["w1a"]); h = gelu(gn(h, params["g1a"], params["b1a"]))
    h = conv3(h, params["w1b"]); h = gn(h, params["g1b"], params["b1b"])
    h1 = gelu(h0 + h)

    h = conv3(h1, params["w2a"]); h = gelu(gn(h, params["g2a"], params["b2a"]))
    h = conv3(h, params["w2b"]); h2 = gn(h, params["g2b"], params["b2b"])

    emb = (t * jax.nn.sigmoid(t)) @ params["we"].T + params["be"][:, 0][None, :]
    return h2 + emb[:, :, None]


if __name__ == "__main__":
    key = jax.random.PRNGKey(0)
    kx, ks, kt, kp = jax.random.split(key, 4)

    B = 2
    c_x, c_skip = 8, 8                 # concat -> in_channels = 16
    in_channels = c_x + c_skip
    out_channels = 8
    L = 8                              # upsampled length = 16
    emb_dim = 32

    x = jax.random.normal(kx, (B, c_x, L), jnp.float32)
    skip_x = jax.random.normal(ks, (B, c_skip, 2 * L), jnp.float32)
    t = jax.random.normal(kt, (B, emb_dim), jnp.float32)
    params = init_params(kp, in_channels, out_channels, emb_dim)

    out = up_forward(x, skip_x, t, params)
    out = jax.block_until_ready(out)

    ref = _reference(x, skip_x, t, params)
    assert out.shape == (B, out_channels, 2 * L), out.shape
    assert jnp.allclose(out, ref, atol=1e-4, rtol=1e-4), float(jnp.max(jnp.abs(out - ref)))

    print("KERNEL_OK")
</pallas_src>

<mosaic_0001>
module attributes {stable_mosaic.version = 11 : i64} {
  func.func @_up_kernel(%arg0: i32, %arg1: memref<8x16xf32, #tpu.memory_space<vmem>>, %arg2: memref<1x8x8xf32, #tpu.memory_space<vmem>>, %arg3: memref<1x8x16xf32, #tpu.memory_space<vmem>>, %arg4: memref<1x32x1xf32, #tpu.memory_space<vmem>>, %arg5: memref<3x16x16xf32, #tpu.memory_space<vmem>>, %arg6: memref<16x1xf32, #tpu.memory_space<vmem>>, %arg7: memref<16x1xf32, #tpu.memory_space<vmem>>, %arg8: memref<3x16x16xf32, #tpu.memory_space<vmem>>, %arg9: memref<16x1xf32, #tpu.memory_space<vmem>>, %arg10: memref<16x1xf32, #tpu.memory_space<vmem>>, %arg11: memref<3x8x16xf32, #tpu.memory_space<vmem>>, %arg12: memref<8x1xf32, #tpu.memory_space<vmem>>, %arg13: memref<8x1xf32, #tpu.memory_space<vmem>>, %arg14: memref<3x8x8xf32, #tpu.memory_space<vmem>>, %arg15: memref<8x1xf32, #tpu.memory_space<vmem>>, %arg16: memref<8x1xf32, #tpu.memory_space<vmem>>, %arg17: memref<8x32xf32, #tpu.memory_space<vmem>>, %arg18: memref<8x1xf32, #tpu.memory_space<vmem>>, %arg19: memref<1x8x16xf32, #tpu.memory_space<vmem>>) attributes {dimension_semantics = [#tpu.dimension_semantics<parallel>], iteration_bounds = array<i64: 2>, scalar_prefetch = 0 : i64, scratch_operands = 0 : i64, tpu.core_type = #tpu.core_type<tc>, window_params = [{pipeline_mode = #tpu.pipeline_mode<synchronous>, transform_indices = @transform_0, window_bounds = array<i64: 8, 16>}, {transform_indices = @transform_1, window_bounds = array<i64: 1, 8, 8>}, {transform_indices = @transform_2, window_bounds = array<i64: 1, 8, 16>}, {transform_indices = @transform_3, window_bounds = array<i64: 1, 32, 1>}, {pipeline_mode = #tpu.pipeline_mode<synchronous>, transform_indices = @transform_4, window_bounds = array<i64: 3, 16, 16>}, {pipeline_mode = #tpu.pipeline_mode<synchronous>, transform_indices = @transform_5, window_bounds = array<i64: 16, 1>}, {pipeline_mode = #tpu.pipeline_mode<synchronous>, transform_indices = @transform_6, window_bounds = array<i64: 16, 1>}, {pipeline_mode = #tpu.pipeline_mode<synchronous>, transform_indices = @transform_7, window_bounds = array<i64: 3, 16, 16>}, {pipeline_mode = #tpu.pipeline_mode<synchronous>, transform_indices = @transform_8, window_bounds = array<i64: 16, 1>}, {pipeline_mode = #tpu.pipeline_mode<synchronous>, transform_indices = @transform_9, window_bounds = array<i64: 16, 1>}, {pipeline_mode = #tpu.pipeline_mode<synchronous>, transform_indices = @transform_10, window_bounds = array<i64: 3, 8, 16>}, {pipeline_mode = #tpu.pipeline_mode<synchronous>, transform_indices = @transform_11, window_bounds = array<i64: 8, 1>}, {pipeline_mode = #tpu.pipeline_mode<synchronous>, transform_indices = @transform_12, window_bounds = array<i64: 8, 1>}, {pipeline_mode = #tpu.pipeline_mode<synchronous>, transform_indices = @transform_13, window_bounds = array<i64: 3, 8, 8>}, {pipeline_mode = #tpu.pipeline_mode<synchronous>, transform_indices = @transform_14, window_bounds = array<i64: 8, 1>}, {pipeline_mode = #tpu.pipeline_mode<synchronous>, transform_indices = @transform_15, window_bounds = array<i64: 8, 1>}, {pipeline_mode = #tpu.pipeline_mode<synchronous>, transform_indices = @transform_16, window_bounds = array<i64: 8, 32>}, {pipeline_mode = #tpu.pipeline_mode<synchronous>, transform_indices = @transform_17, window_bounds = array<i64: 8, 1>}, {transform_indices = @transform_18, window_bounds = array<i64: 1, 8, 16>}]} {
    %c0 = arith.constant 0 : index
    %c0_0 = arith.constant 0 : index
    %c0_1 = arith.constant 0 : index
    %0 = vector.load %arg2[%c0, %c0_0, %c0_1] : memref<1x8x8xf32, #tpu.memory_space<vmem>>, vector<1x8x8xf32>
    %1 = vector.shape_cast %0 : vector<1x8x8xf32> to vector<8x8xf32>
    %c0_2 = arith.constant 0 : index
    %c0_3 = arith.constant 0 : index
    %2 = vector.load %arg1[%c0_2, %c0_3] : memref<8x16xf32, #tpu.memory_space<vmem>>, vector<8x16xf32>
    %cst = arith.constant dense<0.000000e+00> : vector<8x16xf32>
    %3 = tpu.matmul %1, %2, %cst {dimension_numbers = #tpu.dot_dimension_numbers<[1], [0], [0], [1], [0, 0, 1, 1], [], []>} : vector<8x8xf32>, vector<8x16xf32>, vector<8x16xf32> -> vector<8x16xf32>
    %c0_4 = arith.constant 0 : index
    %c0_5 = arith.constant 0 : index
    %c0_6 = arith.constant 0 : index
    %4 = vector.load %arg3[%c0_4, %c0_5, %c0_6] : memref<1x8x16xf32, #tpu.memory_space<vmem>>, vector<1x8x16xf32>
    %5 = vector.shape_cast %4 : vector<1x8x16xf32> to vector<8x16xf32>
    %6 = tpu.concatenate %5, %3 in 0 : vector<8x16xf32>, vector<8x16xf32> -> vector<16x16xf32>
    %cst_7 = arith.constant 0.000000e+00 : f32
    %7 = vector.broadcast %cst_7 : f32 to vector<16x1xf32>
    %8 = tpu.concatenate %7, %6, %7 in 1 : vector<16x1xf32>, vector<16x16xf32>, vector<16x1xf32> -> vector<16x18xf32>
    %c0_8 = arith.constant 0 : index
    %c0_9 = arith.constant 0 : index
    %c0_10 = arith.constant 0 : index
    %9 = vector.load %arg5[%c0_8, %c0_9, %c0_10] : memref<3x16x16xf32, #tpu.memory_space<vmem>>, vector<1x16x16xf32>
    %10 = vector.shape_cast %9 : vector<1x16x16xf32> to vector<16x16xf32>
    %11 = vector.extract_strided_slice %8 {offsets = [0, 0], sizes = [16, 16], strides = [1, 1]} : vector<16x18xf32> to vector<16x16xf32>
    %cst_11 = arith.constant dense<0.000000e+00> : vector<16x16xf32>
    %12 = tpu.matmul %10, %11, %cst_11 {dimension_numbers = #tpu.dot_dimension_numbers<[1], [0], [0], [1], [0, 0, 1, 1], [], []>} : vector<16x16xf32>, vector<16x16xf32>, vector<16x16xf32> -> vector<16x16xf32>
    %c1 = arith.constant 1 : index
    %c0_12 = arith.constant 0 : index
    %c0_13 = arith.constant 0 : index
    %13 = vector.load %arg5[%c1, %c0_12, %c0_13] : memref<3x16x16xf32, #tpu.memory_space<vmem>>, vector<1x16x16xf32>
    %14 = vector.shape_cast %13 : vector<1x16x16xf32> to vector<16x16xf32>
    %15 = vector.extract_strided_slice %8 {offsets = [0, 1], sizes = [16, 16], strides = [1, 1]} : vector<16x18xf32> to vector<16x16xf32>
    %cst_14 = arith.constant dense<0.000000e+00> : vector<16x16xf32>
    %16 = tpu.matmul %14, %15, %cst_14 {dimension_numbers = #tpu.dot_dimension_numbers<[1], [0], [0], [1], [0, 0, 1, 1], [], []>} : vector<16x16xf32>, vector<16x16xf32>, vector<16x16xf32> -> vector<16x16xf32>
    %17 = arith.addf %12, %16 : vector<16x16xf32>
    %c2 = arith.constant 2 : index
    %c0_15 = arith.constant 0 : index
    %c0_16 = arith.constant 0 : index
    %18 = vector.load %arg5[%c2, %c0_15, %c0_16] : memref<3x16x16xf32, #tpu.memory_space<vmem>>, vector<1x16x16xf32>
    %19 = vector.shape_cast %18 : vector<1x16x16xf32> to vector<16x16xf32>
    %20 = vector.extract_strided_slice %8 {offsets = [0, 2], sizes = [16, 16], strides = [1, 1]} : vector<16x18xf32> to vector<16x16xf32>
    %cst_17 = arith.constant dense<0.000000e+00> : vector<16x16xf32>
    %21 = tpu.matmul %19, %20, %cst_17 {dimension_numbers = #tpu.dot_dimension_numbers<[1], [0], [0], [1], [0, 0, 1, 1], [], []>} : vector<16x16xf32>, vector<16x16xf32>, vector<16x16xf32> -> vector<16x16xf32>
    %22 = arith.addf %17, %21 : vector<16x16xf32>
    %cst_18 = arith.constant dense<0.000000e+00> : vector<16xf32>
    %23 = vector.multi_reduction <add>, %22, %cst_18 [1] : vector<16x16xf32> to vector<16xf32>
    %24 = vector.shape_cast %23 : vector<16xf32> to vector<16x1xf32>
    %cst_19 = arith.constant dense<0.000000e+00> : vector<1xf32>
    %25 = vector.multi_reduction <add>, %24, %cst_19 [0] : vector<16x1xf32> to vector<1xf32>
    %26 = vector.shape_cast %25 : vector<1xf32> to vector<1x1xf32>
    %cst_20 = arith.constant 3.906250e-03 : f32
    %27 = vector.broadcast %cst_20 : f32 to vector<1x1xf32>
    %28 = arith.mulf %26, %27 : vector<1x1xf32>
    %29 = vector.broadcast %28 : vector<1x1xf32> to vector<16x16xf32>
    %30 = arith.subf %22, %29 : vector<16x16xf32>
    %31 = arith.mulf %30, %30 : vector<16x16xf32>
    %cst_21 = arith.constant dense<0.000000e+00> : vector<16xf32>
    %32 = vector.multi_reduction <add>, %31, %cst_21 [1] : vector<16x16xf32> to vector<16xf32>
    %33 = vector.shape_cast %32 : vector<16xf32> to vector<16x1xf32>
    %cst_22 = arith.constant dense<0.000000e+00> : vector<1xf32>
    %34 = vector.multi_reduction <add>, %33, %cst_22 [0] : vector<16x1xf32> to vector<1xf32>
    %35 = vector.shape_cast %34 : vector<1xf32> to vector<1x1xf32>
    %cst_23 = arith.constant 3.906250e-03 : f32
    %36 = vector.broadcast %cst_23 : f32 to vector<1x1xf32>
    %37 = arith.mulf %35, %36 : vector<1x1xf32>
    %cst_24 = arith.constant 9.99999974E-6 : f32
    %38 = vector.broadcast %cst_24 : f32 to vector<1x1xf32>
    %39 = arith.addf %37, %38 : vector<1x1xf32>
    %40 = math.rsqrt %39 : vector<1x1xf32>
    %41 = vector.broadcast %40 : vector<1x1xf32> to vector<16x16xf32>
    %42 = arith.mulf %30, %41 : vector<16x16xf32>
    %c0_25 = arith.constant 0 : index
    %c0_26 = arith.constant 0 : index
    %43 = vector.load %arg6[%c0_25, %c0_26] : memref<16x1xf32, #tpu.memory_space<vmem>>, vector<16x1xf32>
    %44 = vector.broadcast %43 : vector<16x1xf32> to vector<16x16xf32>
    %45 = arith.mulf %42, %44 : vector<16x16xf32>
    %c0_27 = arith.constant 0 : index
    %c0_28 = arith.constant 0 : index
    %46 = vector.load %arg7[%c0_27, %c0_28] : memref<16x1xf32, #tpu.memory_space<vmem>>, vector<16x1xf32>
    %47 = vector.broadcast %46 : vector<16x1xf32> to vector<16x16xf32>
    %48 = arith.addf %45, %47 : vector<16x16xf32>
    %cst_29 = arith.constant 5.000000e-01 : f32
    %49 = vector.broadcast %cst_29 : f32 to vector<16x16xf32>
    %50 = arith.mulf %49, %48 : vector<16x16xf32>
    %cst_30 = arith.constant 0.707106769 : f32
    %51 = vector.broadcast %cst_30 : f32 to vector<16x16xf32>
    %52 = arith.mulf %48, %51 : vector<16x16xf32>
    %53 = math.absf %52 : vector<16x16xf32>
    %cst_31 = arith.constant 0.327591091 : f32
    %54 = vector.broadcast %cst_31 : f32 to vector<16x16xf32>
    %55 = arith.mulf %54, %53 : vector<16x16xf32>
    %cst_32 = arith.constant 1.000000e+00 : f32
    %56 = vector.broadcast %cst_32 : f32 to vector<16x16xf32>
    %57 = arith.addf %56, %55 : vector<16x16xf32>
    %cst_33 = arith.constant 1.000000e+00 : f32
    %58 = vector.broadcast %cst_33 : f32 to vector<16x16xf32>
    %59 = arith.divf %58, %57 : vector<16x16xf32>
    %cst_34 = arith.constant 1.06140542 : f32
    %60 = vector.broadcast %cst_34 : f32 to vector<16x16xf32>
    %61 = arith.mulf %60, %59 : vector<16x16xf32>
    %cst_35 = arith.constant -1.45315206 : f32
    %62 = vector.broadcast %cst_35 : f32 to vector<16x16xf32>
    %63 = arith.addf %61, %62 : vector<16x16xf32>
    %64 = arith.mulf %63, %59 : vector<16x16xf32>
    %cst_36 = arith.constant 1.42141378 : f32
    %65 = vector.broadcast %cst_36 : f32 to vector<16x16xf32>
    %66 = arith.addf %64, %65 : vector<16x16xf32>
    %67 = arith.mulf %66, %59 : vector<16x16xf32>
    %cst_37 = arith.constant -0.284496725 : f32
    %68 = vector.broadcast %cst_37 : f32 to vector<16x16xf32>
    %69 = arith.addf %67, %68 : vector<16x16xf32>
    %70 = arith.mulf %69, %59 : vector<16x16xf32>
    %cst_38 = arith.constant 0.254829586 : f32
    %71 = vector.broadcast %cst_38 : f32 to vector<16x16xf32>
    %72 = arith.addf %70, %71 : vector<16x16xf32>
    %73 = arith.mulf %72, %59 : vector<16x16xf32>
    %74 = arith.mulf %53, %53 : vector<16x16xf32>
    %cst_39 = arith.constant 0.000000e+00 : f32
    %75 = vector.broadcast %cst_39 : f32 to vector<16x16xf32>
    %76 = arith.subf %75, %74 : vector<16x16xf32>
    %77 = math.exp %76 : vector<16x16xf32>
    %78 = arith.mulf %73, %77 : vector<16x16xf32>
    %cst_40 = arith.constant 1.000000e+00 : f32
    %79 = vector.broadcast %cst_40 : f32 to vector<16x16xf32>
    %80 = arith.subf %79, %78 : vector<16x16xf32>
    %cst_41 = arith.constant 0.000000e+00 : f32
    %81 = vector.broadcast %cst_41 : f32 to vector<16x16xf32>
    %82 = arith.cmpf olt, %52, %81 : vector<16x16xf32>
    %cst_42 = arith.constant 0.000000e+00 : f32
    %83 = vector.broadcast %cst_42 : f32 to vector<16x16xf32>
    %84 = arith.subf %83, %80 : vector<16x16xf32>
    %85 = arith.select %82, %84, %80 : vector<16x16xi1>, vector<16x16xf32>
    %cst_43 = arith.constant 1.000000e+00 : f32
    %86 = vector.broadcast %cst_43 : f32 to vector<16x16xf32>
    %87 = arith.addf %86, %85 : vector<16x16xf32>
    %88 = arith.mulf %50, %87 : vector<16x16xf32>
    %cst_44 = arith.constant 0.000000e+00 : f32
    %89 = vector.broadcast %cst_44 : f32 to vector<16x1xf32>
    %90 = tpu.concatenate %89, %88, %89 in 1 : vector<16x1xf32>, vector<16x16xf32>, vector<16x1xf32> -> vector<16x18xf32>
    %c0_45 = arith.constant 0 : index
    %c0_46 = arith.constant 0 : index
    %c0_47 = arith.constant 0 : index
    %91 = vector.load %arg8[%c0_45, %c0_46, %c0_47] : memref<3x16x16xf32, #tpu.memory_space<vmem>>, vector<1x16x16xf32>
    %92 = vector.shape_cast %91 : vector<1x16x16xf32> to vector<16x16xf32>
    %93 = vector.extract_strided_slice %90 {offsets = [0, 0], sizes = [16, 16], strides = [1, 1]} : vector<16x18xf32> to vector<16x16xf32>
    %cst_48 = arith.constant dense<0.000000e+00> : vector<16x16xf32>
    %94 = tpu.matmul %92, %93, %cst_48 {dimension_numbers = #tpu.dot_dimension_numbers<[1], [0], [0], [1], [0, 0, 1, 1], [], []>} : vector<16x16xf32>, vector<16x16xf32>, vector<16x16xf32> -> vector<16x16xf32>
    %c1_49 = arith.constant 1 : index
    %c0_50 = arith.constant 0 : index
    %c0_51 = arith.constant 0 : index
    %95 = vector.load %arg8[%c1_49, %c0_50, %c0_51] : memref<3x16x16xf32, #tpu.memory_space<vmem>>, vector<1x16x16xf32>
    %96 = vector.shape_cast %95 : vector<1x16x16xf32> to vector<16x16xf32>
    %97 = vector.extract_strided_slice %90 {offsets = [0, 1], sizes = [16, 16], strides = [1, 1]} : vector<16x18xf32> to vector<16x16xf32>
    %cst_52 = arith.constant dense<0.000000e+00> : vector<16x16xf32>
    %98 = tpu.matmul %96, %97, %cst_52 {dimension_numbers = #tpu.dot_dimension_numbers<[1], [0], [0], [1], [0, 0, 1, 1], [], []>} : vector<16x16xf32>, vector<16x16xf32>, vector<16x16xf32> -> vector<16x16xf32>
    %99 = arith.addf %94, %98 : vector<16x16xf32>
    %c2_53 = arith.constant 2 : index
    %c0_54 = arith.constant 0 : index
    %c0_55 = arith.constant 0 : index
    %100 = vector.load %arg8[%c2_53, %c0_54, %c0_55] : memref<3x16x16xf32, #tpu.memory_space<vmem>>, vector<1x16x16xf32>
    %101 = vector.shape_cast %100 : vector<1x16x16xf32> to vector<16x16xf32>
    %102 = vector.extract_strided_slice %90 {offsets = [0, 2], sizes = [16, 16], strides = [1, 1]} : vector<16x18xf32> to vector<16x16xf32>
    %cst_56 = arith.constant dense<0.000000e+00> : vector<16x16xf32>
    %103 = tpu.matmul %101, %102, %cst_56 {dimension_numbers = #tpu.dot_dimension_numbers<[1], [0], [0], [1], [0, 0, 1, 1], [], []>} : vector<16x16xf32>, vector<16x16xf32>, vector<16x16xf32> -> vector<16x16xf32>
    %104 = arith.addf %99, %103 : vector<16x16xf32>
    %cst_57 = arith.constant dense<0.000000e+00> : vector<16xf32>
    %105 = vector.multi_reduction <add>, %104, %cst_57 [1] : vector<16x16xf32> to vector<16xf32>
    %106 = vector.shape_cast %105 : vector<16xf32> to vector<16x1xf32>
    %cst_58 = arith.constant dense<0.000000e+00> : vector<1xf32>
    %107 = vector.multi_reduction <add>, %106, %cst_58 [0] : vector<16x1xf32> to vector<1xf32>
    %108 = vector.shape_cast %107 : vector<1xf32> to vector<1x1xf32>
    %cst_59 = arith.constant 3.906250e-03 : f32
    %109 = vector.broadcast %cst_59 : f32 to vector<1x1xf32>
    %110 = arith.mulf %108, %109 : vector<1x1xf32>
    %111 = vector.broadcast %110 : vector<1x1xf32> to vector<16x16xf32>
    %112 = arith.subf %104, %111 : vector<16x16xf32>
    %113 = arith.mulf %112, %112 : vector<16x16xf32>
    %cst_60 = arith.constant dense<0.000000e+00> : vector<16xf32>
    %114 = vector.multi_reduction <add>, %113, %cst_60 [1] : vector<16x16xf32> to vector<16xf32>
    %115 = vector.shape_cast %114 : vector<16xf32> to vector<16x1xf32>
    %cst_61 = arith.constant dense<0.000000e+00> : vector<1xf32>
    %116 = vector.multi_reduction <add>, %115, %cst_61 [0] : vector<16x1xf32> to vector<1xf32>
    %117 = vector.shape_cast %116 : vector<1xf32> to vector<1x1xf32>
    %cst_62 = arith.constant 3.906250e-03 : f32
    %118 = vector.broadcast %cst_62 : f32 to vector<1x1xf32>
    %119 = arith.mulf %117, %118 : vector<1x1xf32>
    %cst_63 = arith.constant 9.99999974E-6 : f32
    %120 = vector.broadcast %cst_63 : f32 to vector<1x1xf32>
    %121 = arith.addf %119, %120 : vector<1x1xf32>
    %122 = math.rsqrt %121 : vector<1x1xf32>
    %123 = vector.broadcast %122 : vector<1x1xf32> to vector<16x16xf32>
    %124 = arith.mulf %112, %123 : vector<16x16xf32>
    %c0_64 = arith.constant 0 : index
    %c0_65 = arith.constant 0 : index
    %125 = vector.load %arg9[%c0_64, %c0_65] : memref<16x1xf32, #tpu.memory_space<vmem>>, vector<16x1xf32>
    %126 = vector.broadcast %125 : vector<16x1xf32> to vector<16x16xf32>
    %127 = arith.mulf %124, %126 : vector<16x16xf32>
    %c0_66 = arith.constant 0 : index
    %c0_67 = arith.constant 0 : index
    %128 = vector.load %arg10[%c0_66, %c0_67] : memref<16x1xf32, #tpu.memory_space<vmem>>, vector<16x1xf32>
    %129 = vector.broadcast %128 : vector<16x1xf32> to vector<16x16xf32>
    %130 = arith.addf %127, %129 : vector<16x16xf32>
    %131 = arith.addf %6, %130 : vector<16x16xf32>
    %cst_68 = arith.constant 5.000000e-01 : f32
    %132 = vector.broadcast %cst_68 : f32 to vector<16x16xf32>
    %133 = arith.mulf %132, %131 : vector<16x16xf32>
    %cst_69 = arith.constant 0.707106769 : f32
    %134 = vector.broadcast %cst_69 : f32 to vector<16x16xf32>
    %135 = arith.mulf %131, %134 : vector<16x16xf32>
    %136 = math.absf %135 : vector<16x16xf32>
    %cst_70 = arith.constant 0.327591091 : f32
    %137 = vector.broadcast %cst_70 : f32 to vector<16x16xf32>
    %138 = arith.mulf %137, %136 : vector<16x16xf32>
    %cst_71 = arith.constant 1.000000e+00 : f32
    %139 = vector.broadcast %cst_71 : f32 to vector<16x16xf32>
    %140 = arith.addf %139, %138 : vector<16x16xf32>
    %cst_72 = arith.constant 1.000000e+00 : f32
    %141 = vector.broadcast %cst_72 : f32 to vector<16x16xf32>
    %142 = arith.divf %141, %140 : vector<16x16xf32>
    %cst_73 = arith.constant 1.06140542 : f32
    %143 = vector.broadcast %cst_73 : f32 to vector<16x16xf32>
    %144 = arith.mulf %143, %142 : vector<16x16xf32>
    %cst_74 = arith.constant -1.45315206 : f32
    %145 = vector.broadcast %cst_74 : f32 to vector<16x16xf32>
    %146 = arith.addf %144, %145 : vector<16x16xf32>
    %147 = arith.mulf %146, %142 : vector<16x16xf32>
    %cst_75 = arith.constant 1.42141378 : f32
    %148 = vector.broadcast %cst_75 : f32 to vector<16x16xf32>
    %149 = arith.addf %147, %148 : vector<16x16xf32>
    %150 = arith.mulf %149, %142 : vector<16x16xf32>
    %cst_76 = arith.constant -0.284496725 : f32
    %151 = vector.broadcast %cst_76 : f32 to vector<16x16xf32>
    %152 = arith.addf %150, %151 : vector<16x16xf32>
    %153 = arith.mulf %152, %142 : vector<16x16xf32>
    %cst_77 = arith.constant 0.254829586 : f32
    %154 = vector.broadcast %cst_77 : f32 to vector<16x16xf32>
    %155 = arith.addf %153, %154 : vector<16x16xf32>
    %156 = arith.mulf %155, %142 : vector<16x16xf32>
    %157 = arith.mulf %136, %136 : vector<16x16xf32>
    %cst_78 = arith.constant 0.000000e+00 : f32
    %158 = vector.broadcast %cst_78 : f32 to vector<16x16xf32>
    %159 = arith.subf %158, %157 : vector<16x16xf32>
    %160 = math.exp %159 : vector<16x16xf32>
    %161 = arith.mulf %156, %160 : vector<16x16xf32>
    %cst_79 = arith.constant 1.000000e+00 : f32
    %162 = vector.broadcast %cst_79 : f32 to vector<16x16xf32>
    %163 = arith.subf %162, %161 : vector<16x16xf32>
    %cst_80 = arith.constant 0.000000e+00 : f32
    %164 = vector.broadcast %cst_80 : f32 to vector<16x16xf32>
    %165 = arith.cmpf olt, %135, %164 : vector<16x16xf32>
    %cst_81 = arith.constant 0.000000e+00 : f32
    %166 = vector.broadcast %cst_81 : f32 to vector<16x16xf32>
    %167 = arith.subf %166, %163 : vector<16x16xf32>
    %168 = arith.select %165, %167, %163 : vector<16x16xi1>, vector<16x16xf32>
    %cst_82 = arith.constant 1.000000e+00 : f32
    %169 = vector.broadcast %cst_82 : f32 to vector<16x16xf32>
    %170 = arith.addf %169, %168 : vector<16x16xf32>
    %171 = arith.mulf %133, %170 : vector<16x16xf32>
    %cst_83 = arith.constant 0.000000e+00 : f32
    %172 = vector.broadcast %cst_83 : f32 to vector<16x1xf32>
    %173 = tpu.concatenate %172, %171, %172 in 1 : vector<16x1xf32>, vector<16x16xf32>, vector<16x1xf32> -> vector<16x18xf32>
    %c0_84 = arith.constant 0 : index
    %c0_85 = arith.constant 0 : index
    %c0_86 = arith.constant 0 : index
    %174 = vector.load %arg11[%c0_84, %c0_85, %c0_86] : memref<3x8x16xf32, #tpu.memory_space<vmem>>, vector<1x8x16xf32>
    %175 = vector.shape_cast %174 : vector<1x8x16xf32> to vector<8x16xf32>
    %176 = vector.extract_strided_slice %173 {offsets = [0, 0], sizes = [16, 16], strides = [1, 1]} : vector<16x18xf32> to vector<16x16xf32>
    %cst_87 = arith.constant dense<0.000000e+00> : vector<8x16xf32>
    %177 = tpu.matmul %175, %176, %cst_87 {dimension_numbers = #tpu.dot_dimension_numbers<[1], [0], [0], [1], [0, 0, 1, 1], [], []>} : vector<8x16xf32>, vector<16x16xf32>, vector<8x16xf32> -> vector<8x16xf32>
    %c1_88 = arith.constant 1 : index
    %c0_89 = arith.constant 0 : index
    %c0_90 = arith.constant 0 : index
    %178 = vector.load %arg11[%c1_88, %c0_89, %c0_90] : memref<3x8x16xf32, #tpu.memory_space<vmem>>, vector<1x8x16xf32>
    %179 = vector.shape_cast %178 : vector<1x8x16xf32> to vector<8x16xf32>
    %180 = vector.extract_strided_slice %173 {offsets = [0, 1], sizes = [16, 16], strides = [1, 1]} : vector<16x18xf32> to vector<16x16xf32>
    %cst_91 = arith.constant dense<0.000000e+00> : vector<8x16xf32>
    %181 = tpu.matmul %179, %180, %cst_91 {dimension_numbers = #tpu.dot_dimension_numbers<[1], [0], [0], [1], [0, 0, 1, 1], [], []>} : vector<8x16xf32>, vector<16x16xf32>, vector<8x16xf32> -> vector<8x16xf32>
    %182 = arith.addf %177, %181 : vector<8x16xf32>
    %c2_92 = arith.constant 2 : index
    %c0_93 = arith.constant 0 : index
    %c0_94 = arith.constant 0 : index
    %183 = vector.load %arg11[%c2_92, %c0_93, %c0_94] : memref<3x8x16xf32, #tpu.memory_space<vmem>>, vector<1x8x16xf32>
    %184 = vector.shape_cast %183 : vector<1x8x16xf32> to vector<8x16xf32>
    %185 = vector.extract_strided_slice %173 {offsets = [0, 2], sizes = [16, 16], strides = [1, 1]} : vector<16x18xf32> to vector<16x16xf32>
    %cst_95 = arith.constant dense<0.000000e+00> : vector<8x16xf32>
    %186 = tpu.matmul %184, %185, %cst_95 {dimension_numbers = #tpu.dot_dimension_numbers<[1], [0], [0], [1], [0, 0, 1, 1], [], []>} : vector<8x16xf32>, vector<16x16xf32>, vector<8x16xf32> -> vector<8x16xf32>
    %187 = arith.addf %182, %186 : vector<8x16xf32>
    %cst_96 = arith.constant dense<0.000000e+00> : vector<8xf32>
    %188 = vector.multi_reduction <add>, %187, %cst_96 [1] : vector<8x16xf32> to vector<8xf32>
    %189 = vector.shape_cast %188 : vector<8xf32> to vector<8x1xf32>
    %cst_97 = arith.constant dense<0.000000e+00> : vector<1xf32>
    %190 = vector.multi_reduction <add>, %189, %cst_97 [0] : vector<8x1xf32> to vector<1xf32>
    %191 = vector.shape_cast %190 : vector<1xf32> to vector<1x1xf32>
    %cst_98 = arith.constant 7.812500e-03 : f32
    %192 = vector.broadcast %cst_98 : f32 to vector<1x1xf32>
    %193 = arith.mulf %191, %192 : vector<1x1xf32>
    %194 = vector.broadcast %193 : vector<1x1xf32> to vector<8x16xf32>
    %195 = arith.subf %187, %194 : vector<8x16xf32>
    %196 = arith.mulf %195, %195 : vector<8x16xf32>
    %cst_99 = arith.constant dense<0.000000e+00> : vector<8xf32>
    %197 = vector.multi_reduction <add>, %196, %cst_99 [1] : vector<8x16xf32> to vector<8xf32>
    %198 = vector.shape_cast %197 : vector<8xf32> to vector<8x1xf32>
    %cst_100 = arith.constant dense<0.000000e+00> : vector<1xf32>
    %199 = vector.multi_reduction <add>, %198, %cst_100 [0] : vector<8x1xf32> to vector<1xf32>
    %200 = vector.shape_cast %199 : vector<1xf32> to vector<1x1xf32>
    %cst_101 = arith.constant 7.812500e-03 : f32
    %201 = vector.broadcast %cst_101 : f32 to vector<1x1xf32>
    %202 = arith.mulf %200, %201 : vector<1x1xf32>
    %cst_102 = arith.constant 9.99999974E-6 : f32
    %203 = vector.broadcast %cst_102 : f32 to vector<1x1xf32>
    %204 = arith.addf %202, %203 : vector<1x1xf32>
    %205 = math.rsqrt %204 : vector<1x1xf32>
    %206 = vector.broadcast %205 : vector<1x1xf32> to vector<8x16xf32>
    %207 = arith.mulf %195, %206 : vector<8x16xf32>
    %c0_103 = arith.constant 0 : index
    %c0_104 = arith.constant 0 : index
    %208 = vector.load %arg12[%c0_103, %c0_104] : memref<8x1xf32, #tpu.memory_space<vmem>>, vector<8x1xf32>
    %209 = vector.broadcast %208 : vector<8x1xf32> to vector<8x16xf32>
    %210 = arith.mulf %207, %209 : vector<8x16xf32>
    %c0_105 = arith.constant 0 : index
    %c0_106 = arith.constant 0 : index
    %211 = vector.load %arg13[%c0_105, %c0_106] : memref<8x1xf32, #tpu.memory_space<vmem>>, vector<8x1xf32>
    %212 = vector.broadcast %211 : vector<8x1xf32> to vector<8x16xf32>
    %213 = arith.addf %210, %212 : vector<8x16xf32>
    %cst_107 = arith.constant 5.000000e-01 : f32
    %214 = vector.broadcast %cst_107 : f32 to vector<8x16xf32>
    %215 = arith.mulf %214, %213 : vector<8x16xf32>
    %cst_108 = arith.constant 0.707106769 : f32
    %216 = vector.broadcast %cst_108 : f32 to vector<8x16xf32>
    %217 = arith.mulf %213, %216 : vector<8x16xf32>
    %218 = math.absf %217 : vector<8x16xf32>
    %cst_109 = arith.constant 0.327591091 : f32
    %219 = vector.broadcast %cst_109 : f32 to vector<8x16xf32>
    %220 = arith.mulf %219, %218 : vector<8x16xf32>
    %cst_110 = arith.constant 1.000000e+00 : f32
    %221 = vector.broadcast %cst_110 : f32 to vector<8x16xf32>
    %222 = arith.addf %221, %220 : vector<8x16xf32>
    %cst_111 = arith.constant 1.000000e+00 : f32
    %223 = vector.broadcast %cst_111 : f32 to vector<8x16xf32>
    %224 = arith.divf %223, %222 : vector<8x16xf32>
    %cst_112 = arith.constant 1.06140542 : f32
    %225 = vector.broadcast %cst_112 : f32 to vector<8x16xf32>
    %226 = arith.mulf %225, %224 : vector<8x16xf32>
    %cst_113 = arith.constant -1.45315206 : f32
    %227 = vector.broadcast %cst_113 : f32 to vector<8x16xf32>
    %228 = arith.addf %226, %227 : vector<8x16xf32>
    %229 = arith.mulf %228, %224 : vector<8x16xf32>
    %cst_114 = arith.constant 1.42141378 : f32
    %230 = vector.broadcast %cst_114 : f32 to vector<8x16xf32>
    %231 = arith.addf %229, %230 : vector<8x16xf32>
    %232 = arith.mulf %231, %224 : vector<8x16xf32>
    %cst_115 = arith.constant -0.284496725 : f32
    %233 = vector.broadcast %cst_115 : f32 to vector<8x16xf32>
    %234 = arith.addf %232, %233 : vector<8x16xf32>
    %235 = arith.mulf %234, %224 : vector<8x16xf32>
    %cst_116 = arith.constant 0.254829586 : f32
    %236 = vector.broadcast %cst_116 : f32 to vector<8x16xf32>
    %237 = arith.addf %235, %236 : vector<8x16xf32>
    %238 = arith.mulf %237, %224 : vector<8x16xf32>
    %239 = arith.mulf %218, %218 : vector<8x16xf32>
    %cst_117 = arith.constant 0.000000e+00 : f32
    %240 = vector.broadcast %cst_117 : f32 to vector<8x16xf32>
    %241 = arith.subf %240, %239 : vector<8x16xf32>
    %242 = math.exp %241 : vector<8x16xf32>
    %243 = arith.mulf %238, %242 : vector<8x16xf32>
    %cst_118 = arith.constant 1.000000e+00 : f32
    %244 = vector.broadcast %cst_118 : f32 to vector<8x16xf32>
    %245 = arith.subf %244, %243 : vector<8x16xf32>
    %cst_119 = arith.constant 0.000000e+00 : f32
    %246 = vector.broadcast %cst_119 : f32 to vector<8x16xf32>
    %247 = arith.cmpf olt, %217, %246 : vector<8x16xf32>
    %cst_120 = arith.constant 0.000000e+00 : f32
    %248 = vector.broadcast %cst_120 : f32 to vector<8x16xf32>
    %249 = arith.subf %248, %245 : vector<8x16xf32>
    %250 = arith.select %247, %249, %245 : vector<8x16xi1>, vector<8x16xf32>
    %cst_121 = arith.constant 1.000000e+00 : f32
    %251 = vector.broadcast %cst_121 : f32 to vector<8x16xf32>
    %252 = arith.addf %251, %250 : vector<8x16xf32>
    %253 = arith.mulf %215, %252 : vector<8x16xf32>
    %cst_122 = arith.constant 0.000000e+00 : f32
    %254 = vector.broadcast %cst_122 : f32 to vector<8x1xf32>
    %255 = tpu.concatenate %254, %253, %254 in 1 : vector<8x1xf32>, vector<8x16xf32>, vector<8x1xf32> -> vector<8x18xf32>
    %c0_123 = arith.constant 0 : index
    %c0_124 = arith.constant 0 : index
    %c0_125 = arith.constant 0 : index
    %256 = vector.load %arg14[%c0_123, %c0_124, %c0_125] : memref<3x8x8xf32, #tpu.memory_space<vmem>>, vector<1x8x8xf32>
    %257 = vector.shape_cast %256 : vector<1x8x8xf32> to vector<8x8xf32>
    %258 = vector.extract_strided_slice %255 {offsets = [0, 0], sizes = [8, 16], strides = [1, 1]} : vector<8x18xf32> to vector<8x16xf32>
    %cst_126 = arith.constant dense<0.000000e+00> : vector<8x16xf32>
    %259 = tpu.matmul %257, %258, %cst_126 {dimension_numbers = #tpu.dot_dimension_numbers<[1], [0], [0], [1], [0, 0, 1, 1], [], []>} : vector<8x8xf32>, vector<8x16xf32>, vector<8x16xf32> -> vector<8x16xf32>
    %c1_127 = arith.constant 1 : index
    %c0_128 = arith.constant 0 : index
    %c0_129 = arith.constant 0 : index
    %260 = vector.load %arg14[%c1_127, %c0_128, %c0_129] : memref<3x8x8xf32, #tpu.memory_space<vmem>>, vector<1x8x8xf32>
    %261 = vector.shape_cast %260 : vector<1x8x8xf32> to vector<8x8xf32>
    %262 = vector.extract_strided_slice %255 {offsets = [0, 1], sizes = [8, 16], strides = [1, 1]} : vector<8x18xf32> to vector<8x16xf32>
    %cst_130 = arith.constant dense<0.000000e+00> : vector<8x16xf32>
    %263 = tpu.matmul %261, %262, %cst_130 {dimension_numbers = #tpu.dot_dimension_numbers<[1], [0], [0], [1], [0, 0, 1, 1], [], []>} : vector<8x8xf32>, vector<8x16xf32>, vector<8x16xf32> -> vector<8x16xf32>
    %264 = arith.addf %259, %263 : vector<8x16xf32>
    %c2_131 = arith.constant 2 : index
    %c0_132 = arith.constant 0 : index
    %c0_133 = arith.constant 0 : index
    %265 = vector.load %arg14[%c2_131, %c0_132, %c0_133] : memref<3x8x8xf32, #tpu.memory_space<vmem>>, vector<1x8x8xf32>
    %266 = vector.shape_cast %265 : vector<1x8x8xf32> to vector<8x8xf32>
    %267 = vector.extract_strided_slice %255 {offsets = [0, 2], sizes = [8, 16], strides = [1, 1]} : vector<8x18xf32> to vector<8x16xf32>
    %cst_134 = arith.constant dense<0.000000e+00> : vector<8x16xf32>
    %268 = tpu.matmul %266, %267, %cst_134 {dimension_numbers = #tpu.dot_dimension_numbers<[1], [0], [0], [1], [0, 0, 1, 1], [], []>} : vector<8x8xf32>, vector<8x16xf32>, vector<8x16xf32> -> vector<8x16xf32>
    %269 = arith.addf %264, %268 : vector<8x16xf32>
    %cst_135 = arith.constant dense<0.000000e+00> : vector<8xf32>
    %270 = vector.multi_reduction <add>, %269, %cst_135 [1] : vector<8x16xf32> to vector<8xf32>
    %271 = vector.shape_cast %270 : vector<8xf32> to vector<8x1xf32>
    %cst_136 = arith.constant dense<0.000000e+00> : vector<1xf32>
    %272 = vector.multi_reduction <add>, %271, %cst_136 [0] : vector<8x1xf32> to vector<1xf32>
    %273 = vector.shape_cast %272 : vector<1xf32> to vector<1x1xf32>
    %cst_137 = arith.constant 7.812500e-03 : f32
    %274 = vector.broadcast %cst_137 : f32 to vector<1x1xf32>
    %275 = arith.mulf %273, %274 : vector<1x1xf32>
    %276 = vector.broadcast %275 : vector<1x1xf32> to vector<8x16xf32>
    %277 = arith.subf %269, %276 : vector<8x16xf32>
    %278 = arith.mulf %277, %277 : vector<8x16xf32>
    %cst_138 = arith.constant dense<0.000000e+00> : vector<8xf32>
    %279 = vector.multi_reduction <add>, %278, %cst_138 [1] : vector<8x16xf32> to vector<8xf32>
    %280 = vector.shape_cast %279 : vector<8xf32> to vector<8x1xf32>
    %cst_139 = arith.constant dense<0.000000e+00> : vector<1xf32>
    %281 = vector.multi_reduction <add>, %280, %cst_139 [0] : vector<8x1xf32> to vector<1xf32>
    %282 = vector.shape_cast %281 : vector<1xf32> to vector<1x1xf32>
    %cst_140 = arith.constant 7.812500e-03 : f32
    %283 = vector.broadcast %cst_140 : f32 to vector<1x1xf32>
    %284 = arith.mulf %282, %283 : vector<1x1xf32>
    %cst_141 = arith.constant 9.99999974E-6 : f32
    %285 = vector.broadcast %cst_141 : f32 to vector<1x1xf32>
    %286 = arith.addf %284, %285 : vector<1x1xf32>
    %287 = math.rsqrt %286 : vector<1x1xf32>
    %288 = vector.broadcast %287 : vector<1x1xf32> to vector<8x16xf32>
    %289 = arith.mulf %277, %288 : vector<8x16xf32>
    %c0_142 = arith.constant 0 : index
    %c0_143 = arith.constant 0 : index
    %290 = vector.load %arg15[%c0_142, %c0_143] : memref<8x1xf32, #tpu.memory_space<vmem>>, vector<8x1xf32>
    %291 = vector.broadcast %290 : vector<8x1xf32> to vector<8x16xf32>
    %292 = arith.mulf %289, %291 : vector<8x16xf32>
    %c0_144 = arith.constant 0 : index
    %c0_145 = arith.constant 0 : index
    %293 = vector.load %arg16[%c0_144, %c0_145] : memref<8x1xf32, #tpu.memory_space<vmem>>, vector<8x1xf32>
    %294 = vector.broadcast %293 : vector<8x1xf32> to vector<8x16xf32>
    %295 = arith.addf %292, %294 : vector<8x16xf32>
    %c0_146 = arith.constant 0 : index
    %c0_147 = arith.constant 0 : index
    %296 = vector.load %arg17[%c0_146, %c0_147] : memref<8x32xf32, #tpu.memory_space<vmem>>, vector<8x32xf32>
    %c0_148 = arith.constant 0 : index
    %c0_149 = arith.constant 0 : index
    %c0_150 = arith.constant 0 : index
    %297 = vector.load %arg4[%c0_148, %c0_149, %c0_150] : memref<1x32x1xf32, #tpu.memory_space<vmem>>, vector<1x32x1xf32>
    %298 = vector.shape_cast %297 : vector<1x32x1xf32> to vector<32x1xf32>
    %cst_151 = arith.constant 0.000000e+00 : f32
    %299 = vector.broadcast %cst_151 : f32 to vector<32x1xf32>
    %300 = arith.subf %299, %298 : vector<32x1xf32>
    %301 = math.exp %300 : vector<32x1xf32>
    %cst_152 = arith.constant 1.000000e+00 : f32
    %302 = vector.broadcast %cst_152 : f32 to vector<32x1xf32>
    %303 = arith.addf %302, %301 : vector<32x1xf32>
    %cst_153 = arith.constant 1.000000e+00 : f32
    %304 = vector.broadcast %cst_153 : f32 to vector<32x1xf32>
    %305 = arith.divf %304, %303 : vector<32x1xf32>
    %306 = arith.mulf %298, %305 : vector<32x1xf32>
    %cst_154 = arith.constant dense<0.000000e+00> : vector<8x1xf32>
    %307 = tpu.matmul %296, %306, %cst_154 {dimension_numbers = #tpu.dot_dimension_numbers<[1], [0], [0], [1], [0, 0, 1, 1], [], []>} : vector<8x32xf32>, vector<32x1xf32>, vector<8x1xf32> -> vector<8x1xf32>
    %c0_155 = arith.constant 0 : index
    %c0_156 = arith.constant 0 : index
    %308 = vector.load %arg18[%c0_155, %c0_156] : memref<8x1xf32, #tpu.memory_space<vmem>>, vector<8x1xf32>
    %309 = arith.addf %307, %308 : vector<8x1xf32>
    %310 = vector.broadcast %309 : vector<8x1xf32> to vector<8x16xf32>
    %311 = arith.addf %295, %310 : vector<8x16xf32>
    %c0_157 = arith.constant 0 : index
    %c0_158 = arith.constant 0 : index
    %c0_159 = arith.constant 0 : index
    %312 = vector.load %arg19[%c0_157, %c0_158, %c0_159] : memref<1x8x16xf32, #tpu.memory_space<vmem>>, vector<1x8x16xf32>
    %313 = vector.shape_cast %312 : vector<1x8x16xf32> to vector<8x16xf32>
    %314 = vector.shape_cast %311 : vector<8x16xf32> to vector<1x8x16xf32>
    tpu.vector_store %arg19[%c0_157, %c0_158, %c0_159], %314 {strides = array<i32>} : memref<1x8x16xf32, #tpu.memory_space<vmem>>, vector<1x8x16xf32>,
    return
  }
  func.func @transform_0(%arg0: i32) -> (i32, i32) {
    %c0_i32 = arith.constant 0 : i32
    %c0_i32_0 = arith.constant 0 : i32
    %c0_i32_1 = arith.constant 0 : i32
    return %c0_i32, %c0_i32_0 : i32, i32
  }
  func.func @transform_1(%arg0: i32) -> (i32, i32, i32) {
    %c0_i32 = arith.constant 0 : i32
    %c0_i32_0 = arith.constant 0 : i32
    %c0_i32_1 = arith.constant 0 : i32
    return %arg0, %c0_i32, %c0_i32_0 : i32, i32, i32
  }
  func.func @transform_2(%arg0: i32) -> (i32, i32, i32) {
    %c0_i32 = arith.constant 0 : i32
    %c0_i32_0 = arith.constant 0 : i32
    %c0_i32_1 = arith.constant 0 : i32
    return %arg0, %c0_i32, %c0_i32_0 : i32, i32, i32
  }
  func.func @transform_3(%arg0: i32) -> (i32, i32, i32) {
    %c0_i32 = arith.constant 0 : i32
    %c0_i32_0 = arith.constant 0 : i32
    %c0_i32_1 = arith.constant 0 : i32
    return %arg0, %c0_i32, %c0_i32_0 : i32, i32, i32
  }
  func.func @transform_4(%arg0: i32) -> (i32, i32, i32) {
    %c0_i32 = arith.constant 0 : i32
    %c0_i32_0 = arith.constant 0 : i32
    %c0_i32_1 = arith.constant 0 : i32
    %c0_i32_2 = arith.constant 0 : i32
    return %c0_i32, %c0_i32_0, %c0_i32_1 : i32, i32, i32
  }
  func.func @transform_5(%arg0: i32) -> (i32, i32) {
    %c0_i32 = arith.constant 0 : i32
    %c0_i32_0 = arith.constant 0 : i32
    %c0_i32_1 = arith.constant 0 : i32
    return %c0_i32, %c0_i32_0 : i32, i32
  }
  func.func @transform_6(%arg0: i32) -> (i32, i32) {
    %c0_i32 = arith.constant 0 : i32
    %c0_i32_0 = arith.constant 0 : i32
    %c0_i32_1 = arith.constant 0 : i32
    return %c0_i32, %c0_i32_0 : i32, i32
  }
  func.func @transform_7(%arg0: i32) -> (i32, i32, i32) {
    %c0_i32 = arith.constant 0 : i32
    %c0_i32_0 = arith.constant 0 : i32
    %c0_i32_1 = arith.constant 0 : i32
    %c0_i32_2 = arith.constant 0 : i32
    return %c0_i32, %c0_i32_0, %c0_i32_1 : i32, i32, i32
  }
  func.func @transform_8(%arg0: i32) -> (i32, i32) {
    %c0_i32 = arith.constant 0 : i32
    %c0_i32_0 = arith.constant 0 : i32
    %c0_i32_1 = arith.constant 0 : i32
    return %c0_i32, %c0_i32_0 : i32, i32
  }
  func.func @transform_9(%arg0: i32) -> (i32, i32) {
    %c0_i32 = arith.constant 0 : i32
    %c0_i32_0 = arith.constant 0 : i32
    %c0_i32_1 = arith.constant 0 : i32
    return %c0_i32, %c0_i32_0 : i32, i32
  }
  func.func @transform_10(%arg0: i32) -> (i32, i32, i32) {
    %c0_i32 = arith.constant 0 : i32
    %c0_i32_0 = arith.constant 0 : i32
    %c0_i32_1 = arith.constant 0 : i32
    %c0_i32_2 = arith.constant 0 : i32
    return %c0_i32, %c0_i32_0, %c0_i32_1 : i32, i32, i32
  }
  func.func @transform_11(%arg0: i32) -> (i32, i32) {
    %c0_i32 = arith.constant 0 : i32
    %c0_i32_0 = arith.constant 0 : i32
    %c0_i32_1 = arith.constant 0 : i32
    return %c0_i32, %c0_i32_0 : i32, i32
  }
  func.func @transform_12(%arg0: i32) -> (i32, i32) {
    %c0_i32 = arith.constant 0 : i32
    %c0_i32_0 = arith.constant 0 : i32
    %c0_i32_1 = arith.constant 0 : i32
    return %c0_i32, %c0_i32_0 : i32, i32
  }
  func.func @transform_13(%arg0: i32) -> (i32, i32, i32) {
    %c0_i32 = arith.constant 0 : i32
    %c0_i32_0 = arith.constant 0 : i32
    %c0_i32_1 = arith.constant 0 : i32
    %c0_i32_2 = arith.constant 0 : i32
    return %c0_i32, %c0_i32_0, %c0_i32_1 : i32, i32, i32
  }
  func.func @transform_14(%arg0: i32) -> (i32, i32) {
    %c0_i32 = arith.constant 0 : i32
    %c0_i32_0 = arith.constant 0 : i32
    %c0_i32_1 = arith.constant 0 : i32
    return %c0_i32, %c0_i32_0 : i32, i32
  }
  func.func @transform_15(%arg0: i32) -> (i32, i32) {
    %c0_i32 = arith.constant 0 : i32
    %c0_i32_0 = arith.constant 0 : i32
    %c0_i32_1 = arith.constant 0 : i32
    return %c0_i32, %c0_i32_0 : i32, i32
  }
  func.func @transform_16(%arg0: i32) -> (i32, i32) {
    %c0_i32 = arith.constant 0 : i32
    %c0_i32_0 = arith.constant 0 : i32
    %c0_i32_1 = arith.constant 0 : i32
    return %c0_i32, %c0_i32_0 : i32, i32
  }
  func.func @transform_17(%arg0: i32) -> (i32, i32) {
    %c0_i32 = arith.constant 0 : i32
    %c0_i32_0 = arith.constant 0 : i32
    %c0_i32_1 = arith.constant 0 : i32
    return %c0_i32, %c0_i32_0 : i32, i32
  }
  func.func @transform_18(%arg0: i32) -> (i32, i32, i32) {
    %c0_i32 = arith.constant 0 : i32
    %c0_i32_0 = arith.constant 0 : i32
    %c0_i32_1 = arith.constant 0 : i32
    return %arg0, %c0_i32, %c0_i32_0 : i32, i32, i32
  }
}

</mosaic_0001>

<llo_original>
// kernel: tpu_custom_call.1
$region0: #{tpu_custom_call.1}
  #allocation0 [shape = 'u32[]', space=smem, size = 0x4, offset = 0x4, fixed_abs, tag = 'smem constant byte address 0x4 - core index']
  #allocation1 [shape = 'u32[72,128]{1,0:T(1,128)}', space=vmem, size = 0x9000, scoped, tag = 'internal scratch']
  %s0 = inlined_call_operand.vmem [shape: f32[8,16], index: 0, kind: input, shape index: {}]
  %s1 = inlined_call_operand.vmem [shape: f32[2,8,8], index: 1, kind: input, shape index: {}]
  %s2 = inlined_call_operand.vmem [shape: f32[2,8,16], index: 2, kind: input, shape index: {}]
  %s3 = inlined_call_operand.vmem [shape: f32[2,32,1], index: 3, kind: input, shape index: {}]
  %s4 = inlined_call_operand.vmem [shape: f32[3,16,16], index: 4, kind: input, shape index: {}]
  %s5 = inlined_call_operand.vmem [shape: f32[16,1], index: 5, kind: input, shape index: {}]
  %s6 = inlined_call_operand.vmem [shape: f32[16,1], index: 6, kind: input, shape index: {}]
  %s7 = inlined_call_operand.hbm [shape: f32[3,16,16], index: 7, kind: input, shape index: {}]
  %s8 = inlined_call_operand.vmem [shape: f32[16,1], index: 8, kind: input, shape index: {}]
  %s9 = inlined_call_operand.vmem [shape: f32[16,1], index: 9, kind: input, shape index: {}]
  %s10 = inlined_call_operand.vmem [shape: f32[3,8,16], index: 10, kind: input, shape index: {}]
  %s11 = inlined_call_operand.vmem [shape: f32[8,1], index: 11, kind: input, shape index: {}]
  %s12 = inlined_call_operand.vmem [shape: f32[8,1], index: 12, kind: input, shape index: {}]
  %s13 = inlined_call_operand.vmem [shape: f32[3,8,8], index: 13, kind: input, shape index: {}]
  %s14 = inlined_call_operand.vmem [shape: f32[8,1], index: 14, kind: input, shape index: {}]
  %s15 = inlined_call_operand.vmem [shape: f32[8,1], index: 15, kind: input, shape index: {}]
  %s16 = inlined_call_operand.vmem [shape: f32[8,32], index: 16, kind: input, shape index: {}]
  %s17 = inlined_call_operand.vmem [shape: f32[8,1], index: 17, kind: input, shape index: {}]
  %s18 = inlined_call_operand.hbm [shape: f32[2,8,16], index: 18, kind: output, shape index: {}]
  %s19 = sld [smem:[#allocation0]]
  $region109: #{tpu_custom_call.1} parent=0
    _
  %s21 = ssub.s32 1, %s19
  %s22 = scalar_select 0, %s21, %s19
  $region1: #{tpu_custom_call.1} parent=0
    #allocation2 [shape = 'u8[24576]{0}', space=vmem, size = 0x6000, scoped, tag = 'input window, operand 7, single buffered']
    #allocation3 [shape = 's32[2]{0}', space=sflag, size = 0x8, scoped, tag = 'scoped memory for tpu_custom_call.1']
    #allocation4 [shape = 's32[2]{0}', space=sflag, size = 0x8, scoped, tag = 'scoped memory for tpu_custom_call.1']
    #allocation5 [shape = 'u8[8192]{0}', space=vmem, size = 0x2000, scoped, tag = 'output window, operand 0']
    %23 = vsyncpa [#allocation3], 0
    %24 = vsyncpa [#allocation4], 0
    %s25 = scalar_lea.sflag [#allocation4], 1
    %26 = vsyncpa %s25, 0
    loop: start=0, step=1, limit=4
    $region2: #{tpu_custom_call.1} parent=1 // loop_pre_header
      _
    $region3: #{tpu_custom_call.1} parent=1 // loop_header
      %s28 = sphi 0, %s32
      %p29 = scmp.ge.s32.totalorder %s28, 4
      %s36 = sphi 0, %s36
      %s38 = sphi 0, %s36
      %s39 = sphi 0, %s38
      %s53 = sphi 0, %s39
      %s59 = sphi 0, %s61
      %s62 = sphi 0, %s59
      %s63 = sphi 0, %s62
      %s79 = sphi 0, %s63
      %s85 = sphi 0, %s87
      %s88 = sphi 0, %s85
      %s89 = sphi 0, %s88
      %s105 = sphi 0, %s89
      %s111 = sphi 0, %s113
      %s114 = sphi 0, %s111
      %s115 = sphi 0, %s114
      %s131 = sphi 0, %s115
      %s135 = sphi 0, %s135
      %s137 = sphi 0, %s135
      %s138 = sphi 0, %s137
      %s152 = sphi 0, %s138
      %s156 = sphi 0, %s156
      %s158 = sphi 0, %s156
      %s159 = sphi 0, %s158
      %s173 = sphi 0, %s159
      %s177 = sphi 0, %s177
      %s179 = sphi 0, %s177
      %s180 = sphi 0, %s179
      %s194 = sphi 0, %s180
      %s198 = sphi 0, %s198
      %s200 = sphi 0, %s198
      %s201 = sphi 0, %s200
      %s215 = sphi 0, %s201
      %s219 = sphi 0, %s219
      %s221 = sphi 0, %s219
      %s222 = sphi 0, %s221
      %s236 = sphi 0, %s222
      %s240 = sphi 0, %s240
      %s242 = sphi 0, %s240
      %s243 = sphi 0, %s242
      %s257 = sphi 0, %s243
      %s261 = sphi 0, %s261
      %s263 = sphi 0, %s261
      %s264 = sphi 0, %s263
      %s278 = sphi 0, %s264
      %s282 = sphi 0, %s282
      %s284 = sphi 0, %s282
      %s285 = sphi 0, %s284
      %s299 = sphi 0, %s285
      %s303 = sphi 0, %s303
      %s305 = sphi 0, %s303
      %s306 = sphi 0, %s305
      %s320 = sphi 0, %s306
      %s324 = sphi 0, %s324
      %s326 = sphi 0, %s324
      %s327 = sphi 0, %s326
      %s341 = sphi 0, %s327
      %s345 = sphi 0, %s345
      %s347 = sphi 0, %s345
      %s348 = sphi 0, %s347
      %s362 = sphi 0, %s348
      %s366 = sphi 0, %s366
      %s368 = sphi 0, %s366
      %s369 = sphi 0, %s368
      %s383 = sphi 0, %s369
      %s387 = sphi 0, %s387
      %s389 = sphi 0, %s387
      %s390 = sphi 0, %s389
      %s404 = sphi 0, %s390
      %s408 = sphi 0, %s408
      %s410 = sphi 0, %s408
      %s411 = sphi 0, %s410
      %s425 = sphi 0, %s411
      %s431 = sphi 0, %s433
      %s434 = sphi 0, %s431
      %s435 = sphi 0, %s434
      %s451 = sphi 0, %s435
    $region4: #{tpu_custom_call.1} parent=1 // loop_header_branch
      %31 = sbr.rel (%p29) target = $region8
    $region5: #{tpu_custom_call.1} parent=1 // loop_body
      %s33 = ssub.s32 %s28, 1
      %s34 = ssub.s32 %s28, 2
      %s35 = sadd.s32 %s28, 1
      %s37 = sadd.s32 %s36, 1
      %p40 = scmp.eq.s32.totalorder %s28, 1
      %p41 = scmp.ne.s32.totalorder %s36, %s38
      %p42 = scmp.eq.s32.totalorder %s28, 0
      %p43 = por %p41, %p42
      %p44 = scmp.ne.s32.totalorder %s36, %s38
      %p45 = scmp.eq.s32.totalorder %s33, 1
      %p46 = por %p44, %p45
      %p47 = scmp.ne.s32.totalorder %s38, %s39
      %p48 = scmp.eq.s32.totalorder %s33, 0
      %p49 = por %p47, %p48
      %p50 = scmp.ne.s32.totalorder %s38, %s39
      %p51 = scmp.eq.s32.totalorder %s34, 1
      %p52 = por %p50, %p51
      %p54 = scmp.ne.s32.totalorder %s39, %s53
      %p55 = scmp.eq.s32.totalorder %s34, 0
      %p56 = por %p54, %p55
      %s57 = ssub.s32 %s28, %s35
      %p58 = scmp.eq.s32.totalorder %s57, 0
      %s60 = sadd.s32 %s59, 1
      %s61 = scalar_select %p58, %s59, %s60
      %p64 = pneg %p58
      %p65 = scmp.eq.s32.totalorder %s28, 1
      %p66 = por %p64, %p65
      %p67 = scmp.ne.s32.totalorder %s59, %s62
      %p68 = scmp.eq.s32.totalorder %s28, 0
      %p69 = por %p67, %p68
      %p70 = scmp.ne.s32.totalorder %s59, %s62
      %p71 = scmp.eq.s32.totalorder %s33, 1
      %p72 = por %p70, %p71
      %p73 = scmp.ne.s32.totalorder %s62, %s63
      %p74 = scmp.eq.s32.totalorder %s33, 0
      %p75 = por %p73, %p74
      %p76 = scmp.ne.s32.totalorder %s62, %s63
      %p77 = scmp.eq.s32.totalorder %s34, 1
      %p78 = por %p76, %p77
      %p80 = scmp.ne.s32.totalorder %s63, %s79
      %p81 = scmp.eq.s32.totalorder %s34, 0
      %p82 = por %p80, %p81
      %s83 = ssub.s32 %s28, %s35
      %p84 = scmp.eq.s32.totalorder %s83, 0
      %s86 = sadd.s32 %s85, 1
      %s87 = scalar_select %p84, %s85, %s86
      %p90 = pneg %p84
      %p91 = scmp.eq.s32.totalorder %s28, 1
      %p92 = por %p90, %p91
      %p93 = scmp.ne.s32.totalorder %s85, %s88
      %p94 = scmp.eq.s32.totalorder %s28, 0
      %p95 = por %p93, %p94
      %p96 = scmp.ne.s32.totalorder %s85, %s88
      %p97 = scmp.eq.s32.totalorder %s33, 1
      %p98 = por %p96, %p97
      %p99 = scmp.ne.s32.totalorder %s88, %s89
      %p100 = scmp.eq.s32.totalorder %s33, 0
      %p101 = por %p99, %p100
      %p102 = scmp.ne.s32.totalorder %s88, %s89
      %p103 = scmp.eq.s32.totalorder %s34, 1
      %p104 = por %p102, %p103
      %p106 = scmp.ne.s32.totalorder %s89, %s105
      %p107 = scmp.eq.s32.totalorder %s34, 0
      %p108 = por %p106, %p107
      %s109 = ssub.s32 %s28, %s35
      %p110 = scmp.eq.s32.totalorder %s109, 0
      %s112 = sadd.s32 %s111, 1
      %s113 = scalar_select %p110, %s111, %s112
      %p116 = pneg %p110
      %p117 = scmp.eq.s32.totalorder %s28, 1
      %p118 = por %p116, %p117
      %p119 = scmp.ne.s32.totalorder %s111, %s114
      %p120 = scmp.eq.s32.totalorder %s28, 0
      %p121 = por %p119, %p120
      %p122 = scmp.ne.s32.totalorder %s111, %s114
      %p123 = scmp.eq.s32.totalorder %s33, 1
      %p124 = por %p122, %p123
      %p125 = scmp.ne.s32.totalorder %s114, %s115
      %p126 = scmp.eq.s32.totalorder %s33, 0
      %p127 = por %p125, %p126
      %p128 = scmp.ne.s32.totalorder %s114, %s115
      %p129 = scmp.eq.s32.totalorder %s34, 1
      %p130 = por %p128, %p129
      %p132 = scmp.ne.s32.totalorder %s115, %s131
      %p133 = scmp.eq.s32.totalorder %s34, 0
      %p134 = por %p132, %p133
      %s136 = sadd.s32 %s135, 1
      %p139 = scmp.eq.s32.totalorder %s28, 1
      %p140 = scmp.ne.s32.totalorder %s135, %s137
      %p141 = scmp.eq.s32.totalorder %s28, 0
      %p142 = por %p140, %p141
      %p143 = scmp.ne.s32.totalorder %s135, %s137
      %p144 = scmp.eq.s32.totalorder %s33, 1
      %p145 = por %p143, %p144
      %p146 = scmp.ne.s32.totalorder %s137, %s138
      %p147 = scmp.eq.s32.totalorder %s33, 0
      %p148 = por %p146, %p147
      %p149 = scmp.ne.s32.totalorder %s137, %s138
      %p150 = scmp.eq.s32.totalorder %s34, 1
      %p151 = por %p149, %p150
      %p153 = scmp.ne.s32.totalorder %s138, %s152
      %p154 = scmp.eq.s32.totalorder %s34, 0
      %p155 = por %p153, %p154
      %s157 = sadd.s32 %s156, 1
      %p160 = scmp.eq.s32.totalorder %s28, 1
      %p161 = scmp.ne.s32.totalorder %s156, %s158
      %p162 = scmp.eq.s32.totalorder %s28, 0
      %p163 = por %p161, %p162
      %p164 = scmp.ne.s32.totalorder %s156, %s158
      %p165 = scmp.eq.s32.totalorder %s33, 1
      %p166 = por %p164, %p165
      %p167 = scmp.ne.s32.totalorder %s158, %s159
      %p168 = scmp.eq.s32.totalorder %s33, 0
      %p169 = por %p167, %p168
      %p170 = scmp.ne.s32.totalorder %s158, %s159
      %p171 = scmp.eq.s32.totalorder %s34, 1
      %p172 = por %p170, %p171
      %p174 = scmp.ne.s32.totalorder %s159, %s173
      %p175 = scmp.eq.s32.totalorder %s34, 0
      %p176 = por %p174, %p175
      %s178 = sadd.s32 %s177, 1
      %p181 = scmp.eq.s32.totalorder %s28, 1
      %p182 = scmp.ne.s32.totalorder %s177, %s179
      %p183 = scmp.eq.s32.totalorder %s28, 0
      %p184 = por %p182, %p183
      %p185 = scmp.ne.s32.totalorder %s177, %s179
      %p186 = scmp.eq.s32.totalorder %s33, 1
      %p187 = por %p185, %p186
      %p188 = scmp.ne.s32.totalorder %s179, %s180
      %p189 = scmp.eq.s32.totalorder %s33, 0
      %p190 = por %p188, %p189
      %p191 = scmp.ne.s32.totalorder %s179, %s180
      %p192 = scmp.eq.s32.totalorder %s34, 1
      %p193 = por %p191, %p192
      %p195 = scmp.ne.s32.totalorder %s180, %s194
      %p196 = scmp.eq.s32.totalorder %s34, 0
      %p197 = por %p195, %p196
      %s199 = sadd.s32 %s198, 1
      %p202 = scmp.eq.s32.totalorder %s28, 1
      %p203 = scmp.ne.s32.totalorder %s198, %s200
      %p204 = scmp.eq.s32.totalorder %s28, 0
      %p205 = por %p203, %p204
      %p206 = scmp.ne.s32.totalorder %s198, %s200
      %p207 = scmp.eq.s32.totalorder %s33, 1
      %p208 = por %p206, %p207
      %p209 = scmp.ne.s32.totalorder %s200, %s201
      %p210 = scmp.eq.s32.totalorder %s33, 0
      %p211 = por %p209, %p210
      %p212 = scmp.ne.s32.totalorder %s200, %s201
      %p213 = scmp.eq.s32.totalorder %s34, 1
      %p214 = por %p212, %p213
      %p216 = scmp.ne.s32.totalorder %s201, %s215
      %p217 = scmp.eq.s32.totalorder %s34, 0
      %p218 = por %p216, %p217
      %s220 = sadd.s32 %s219, 1
      %p223 = scmp.eq.s32.totalorder %s28, 1
      %p224 = scmp.ne.s32.totalorder %s219, %s221
      %p225 = scmp.eq.s32.totalorder %s28, 0
      %p226 = por %p224, %p225
      %p227 = scmp.ne.s32.totalorder %s219, %s221
      %p228 = scmp.eq.s32.totalorder %s33, 1
      %p229 = por %p227, %p228
      %p230 = scmp.ne.s32.totalorder %s221, %s222
      %p231 = scmp.eq.s32.totalorder %s33, 0
      %p232 = por %p230, %p231
      %p233 = scmp.ne.s32.totalorder %s221, %s222
      %p234 = scmp.eq.s32.totalorder %s34, 1
      %p235 = por %p233, %p234
      %p237 = scmp.ne.s32.totalorder %s222, %s236
      %p238 = scmp.eq.s32.totalorder %s34, 0
      %p239 = por %p237, %p238
      %s241 = sadd.s32 %s240, 1
      %p244 = scmp.eq.s32.totalorder %s28, 1
      %p245 = scmp.ne.s32.totalorder %s240, %s242
      %p246 = scmp.eq.s32.totalorder %s28, 0
      %p247 = por %p245, %p246
      %p248 = scmp.ne.s32.totalorder %s240, %s242
      %p249 = scmp.eq.s32.totalorder %s33, 1
      %p250 = por %p248, %p249
      %p251 = scmp.ne.s32.totalorder %s242, %s243
      %p252 = scmp.eq.s32.totalorder %s33, 0
      %p253 = por %p251, %p252
      %p254 = scmp.ne.s32.totalorder %s242, %s243
      %p255 = scmp.eq.s32.totalorder %s34, 1
      %p256 = por %p254, %p255
      %p258 = scmp.ne.s32.totalorder %s243, %s257
      %p259 = scmp.eq.s32.totalorder %s34, 0
      %p260 = por %p258, %p259
      %s262 = sadd.s32 %s261, 1
      %p265 = scmp.eq.s32.totalorder %s28, 1
      %p266 = scmp.ne.s32.totalorder %s261, %s263
      %p267 = scmp.eq.s32.totalorder %s28, 0
      %p268 = por %p266, %p267
      %p269 = scmp.ne.s32.totalorder %s261, %s263
      %p270 = scmp.eq.s32.totalorder %s33, 1
      %p271 = por %p269, %p270
      %p272 = scmp.ne.s32.totalorder %s263, %s264
      %p273 = scmp.eq.s32.totalorder %s33, 0
      %p274 = por %p272, %p273
      %p275 = scmp.ne.s32.totalorder %s263, %s264
      %p276 = scmp.eq.s32.totalorder %s34, 1
      %p277 = por %p275, %p276
      %p279 = scmp.ne.s32.totalorder %s264, %s278
      %p280 = scmp.eq.s32.totalorder %s34, 0
      %p281 = por %p279, %p280
      %s283 = sadd.s32 %s282, 1
      %p286 = scmp.eq.s32.totalorder %s28, 1
      %p287 = scmp.ne.s32.totalorder %s282, %s284
      %p288 = scmp.eq.s32.totalorder %s28, 0
      %p289 = por %p287, %p288
      %p290 = scmp.ne.s32.totalorder %s282, %s284
      %p291 = scmp.eq.s32.totalorder %s33, 1
      %p292 = por %p290, %p291
      %p293 = scmp.ne.s32.totalorder %s284, %s285
      %p294 = scmp.eq.s32.totalorder %s33, 0
      %p295 = por %p293, %p294
      %p296 = scmp.ne.s32.totalorder %s284, %s285
      %p297 = scmp.eq.s32.totalorder %s34, 1
      %p298 = por %p296, %p297
      %p300 = scmp.ne.s32.totalorder %s285, %s299
      %p301 = scmp.eq.s32.totalorder %s34, 0
      %p302 = por %p300, %p301
      %s304 = sadd.s32 %s303, 1
      %p307 = scmp.eq.s32.totalorder %s28, 1
      %p308 = scmp.ne.s32.totalorder %s303, %s305
      %p309 = scmp.eq.s32.totalorder %s28, 0
      %p310 = por %p308, %p309
      %p311 = scmp.ne.s32.totalorder %s303, %s305
      %p312 = scmp.eq.s32.totalorder %s33, 1
      %p313 = por %p311, %p312
      %p314 = scmp.ne.s32.totalorder %s305, %s306
      %p315 = scmp.eq.s32.totalorder %s33, 0
      %p316 = por %p314, %p315
      %p317 = scmp.ne.s32.totalorder %s305, %s306
      %p318 = scmp.eq.s32.totalorder %s34, 1
      %p319 = por %p317, %p318
      %p321 = scmp.ne.s32.totalorder %s306, %s320
      %p322 = scmp.eq.s32.totalorder %s34, 0
      %p323 = por %p321, %p322
      %s325 = sadd.s32 %s324, 1
      %p328 = scmp.eq.s32.totalorder %s28, 1
      %p329 = scmp.ne.s32.totalorder %s324, %s326
      %p330 = scmp.eq.s32.totalorder %s28, 0
      %p331 = por %p329, %p330
      %p332 = scmp.ne.s32.totalorder %s324, %s326
      %p333 = scmp.eq.s32.totalorder %s33, 1
      %p334 = por %p332, %p333
      %p335 = scmp.ne.s32.totalorder %s326, %s327
      %p336 = scmp.eq.s32.totalorder %s33, 0
      %p337 = por %p335, %p336
      %p338 = scmp.ne.s32.totalorder %s326, %s327
      %p339 = scmp.eq.s32.totalorder %s34, 1
      %p340 = por %p338, %p339
      %p342 = scmp.ne.s32.totalorder %s327, %s341
      %p343 = scmp.eq.s32.totalorder %s34, 0
      %p344 = por %p342, %p343
      %s346 = sadd.s32 %s345, 1
      %p349 = scmp.eq.s32.totalorder %s28, 1
      %p350 = scmp.ne.s32.totalorder %s345, %s347
      %p351 = scmp.eq.s32.totalorder %s28, 0
      %p352 = por %p350, %p351
      %p353 = scmp.ne.s32.totalorder %s345, %s347
      %p354 = scmp.eq.s32.totalorder %s33, 1
      %p355 = por %p353, %p354
      %p356 = scmp.ne.s32.totalorder %s347, %s348
      %p357 = scmp.eq.s32.totalorder %s33, 0
      %p358 = por %p356, %p357
      %p359 = scmp.ne.s32.totalorder %s347, %s348
      %p360 = scmp.eq.s32.totalorder %s34, 1
      %p361 = por %p359, %p360
      %p363 = scmp.ne.s32.totalorder %s348, %s362
      %p364 = scmp.eq.s32.totalorder %s34, 0
      %p365 = por %p363, %p364
      %s367 = sadd.s32 %s366, 1
      %p370 = scmp.eq.s32.totalorder %s28, 1
      %p371 = scmp.ne.s32.totalorder %s366, %s368
      %p372 = scmp.eq.s32.totalorder %s28, 0
      %p373 = por %p371, %p372
      %p374 = scmp.ne.s32.totalorder %s366, %s368
      %p375 = scmp.eq.s32.totalorder %s33, 1
      %p376 = por %p374, %p375
      %p377 = scmp.ne.s32.totalorder %s368, %s369
      %p378 = scmp.eq.s32.totalorder %s33, 0
      %p379 = por %p377, %p378
      %p380 = scmp.ne.s32.totalorder %s368, %s369
      %p381 = scmp.eq.s32.totalorder %s34, 1
      %p382 = por %p380, %p381
      %p384 = scmp.ne.s32.totalorder %s369, %s383
      %p385 = scmp.eq.s32.totalorder %s34, 0
      %p386 = por %p384, %p385
      %s388 = sadd.s32 %s387, 1
      %p391 = scmp.eq.s32.totalorder %s28, 1
      %p392 = scmp.ne.s32.totalorder %s387, %s389
      %p393 = scmp.eq.s32.totalorder %s28, 0
      %p394 = por %p392, %p393
      %p395 = scmp.ne.s32.totalorder %s387, %s389
      %p396 = scmp.eq.s32.totalorder %s33, 1
      %p397 = por %p395, %p396
      %p398 = scmp.ne.s32.totalorder %s389, %s390
      %p399 = scmp.eq.s32.totalorder %s33, 0
      %p400 = por %p398, %p399
      %p401 = scmp.ne.s32.totalorder %s389, %s390
      %p402 = scmp.eq.s32.totalorder %s34, 1
      %p403 = por %p401, %p402
      %p405 = scmp.ne.s32.totalorder %s390, %s404
      %p406 = scmp.eq.s32.totalorder %s34, 0
      %p407 = por %p405, %p406
      %s409 = sadd.s32 %s408, 1
      %p412 = scmp.eq.s32.totalorder %s28, 1
      %p413 = scmp.ne.s32.totalorder %s408, %s410
      %p414 = scmp.eq.s32.totalorder %s28, 0
      %p415 = por %p413, %p414
      %p416 = scmp.ne.s32.totalorder %s408, %s410
      %p417 = scmp.eq.s32.totalorder %s33, 1
      %p418 = por %p416, %p417
      %p419 = scmp.ne.s32.totalorder %s410, %s411
      %p420 = scmp.eq.s32.totalorder %s33, 0
      %p421 = por %p419, %p420
      %p422 = scmp.ne.s32.totalorder %s410, %s411
      %p423 = scmp.eq.s32.totalorder %s34, 1
      %p424 = por %p422, %p423
      %p426 = scmp.ne.s32.totalorder %s411, %s425
      %p427 = scmp.eq.s32.totalorder %s34, 0
      %p428 = por %p426, %p427
      %s429 = ssub.s32 %s28, %s35
      %p430 = scmp.eq.s32.totalorder %s429, 0
      %s432 = sadd.s32 %s431, 1
      %s433 = scalar_select %p430, %s431, %s432
      %p436 = pneg %p430
      %p437 = scmp.eq.s32.totalorder %s28, 1
      %p438 = por %p436, %p437
      %p439 = scmp.ne.s32.totalorder %s431, %s434
      %p440 = scmp.eq.s32.totalorder %s28, 0
      %p441 = por %p439, %p440
      %p442 = scmp.ne.s32.totalorder %s431, %s434
      %p443 = scmp.eq.s32.totalorder %s33, 1
      %p444 = por %p442, %p443
      %p445 = scmp.ne.s32.totalorder %s434, %s435
      %p446 = scmp.eq.s32.totalorder %s33, 0
      %p447 = por %p445, %p446
      %p448 = scmp.ne.s32.totalorder %s434, %s435
      %p449 = scmp.eq.s32.totalorder %s34, 1
      %p450 = por %p448, %p449
      %p452 = scmp.ne.s32.totalorder %s435, %s451
      %p453 = scmp.eq.s32.totalorder %s34, 0
      %p454 = por %p452, %p453
      %p455 = scmp.le.s32.totalorder 1, %s28
      %p456 = scmp.lt.s32.totalorder %s28, 3
      %p457 = pnand %p455, %p456
      %p458 = pneg %p457
      // Predicated region
      $region9: #{tpu_custom_call.1} parent=5 // pred_check
        _
      $region10: #{tpu_custom_call.1} parent=5 // pred_check_branch
        %460 = sbr.rel (%p457) target = $region12
      $region11: #{tpu_custom_call.1} parent=5 // pred_region
        %s461 = ssub.s32 %s28, 1
        // Predicated region
        $region13: #{tpu_custom_call.1} parent=11 // pred_check
          %p462 = pneg %p49
        $region14: #{tpu_custom_call.1} parent=11 // pred_check_branch
          %464 = sbr.rel (%p462) target = $region16
        $region15: #{tpu_custom_call.1} parent=11 // pred_region
          _
        $region16: #{tpu_custom_call.1} parent=11 // pred_fallthru
          _
        // Predicated region
        $region17: #{tpu_custom_call.1} parent=11 // pred_check
          %p465 = pneg %p148
        $region18: #{tpu_custom_call.1} parent=11 // pred_check_branch
          %467 = sbr.rel (%p465) target = $region20
        $region19: #{tpu_custom_call.1} parent=11 // pred_region
          _
        $region20: #{tpu_custom_call.1} parent=11 // pred_fallthru
          _
        // Predicated region
        $region21: #{tpu_custom_call.1} parent=11 // pred_check
          %p468 = pneg %p169
        $region22: #{tpu_custom_call.1} parent=11 // pred_check_branch
          %470 = sbr.rel (%p468) target = $region24
        $region23: #{tpu_custom_call.1} parent=11 // pred_region
          _
        $region24: #{tpu_custom_call.1} parent=11 // pred_fallthru
          _
        // Predicated region
        $region25: #{tpu_custom_call.1} parent=11 // pred_check
          %p471 = pneg %p190
        $region26: #{tpu_custom_call.1} parent=11 // pred_check_branch
          %473 = sbr.rel (%p471) target = $region28
        $region27: #{tpu_custom_call.1} parent=11 // pred_region
          _
        $region28: #{tpu_custom_call.1} parent=11 // pred_fallthru
          _
        // Predicated region
        $region29: #{tpu_custom_call.1} parent=11 // pred_check
          %p474 = pneg %p211
        $region30: #{tpu_custom_call.1} parent=11 // pred_check_branch
          %476 = sbr.rel (%p474) target = $region32
        $region31: #{tpu_custom_call.1} parent=11 // pred_region
          %478 = vsyncadd [#allocation3], 0
          %s479 = sshll.u32 %s7, 4
          %s480 = int_to_ptr.hbm [resolvable:$true] %s479
          %s481 = sshll.u32 [#allocation2], 4
          %s482 = int_to_ptr.vmem [resolvable:$true] %s481
          %487 = dma.hbm_to_vmem [thread:$0]  %s480, 768, %s482, [#allocation3], 128, 128, 8
        $region32: #{tpu_custom_call.1} parent=11 // pred_fallthru
          _
        // Predicated region
        $region33: #{tpu_custom_call.1} parent=11 // pred_check
          %p488 = pneg %p232
        $region34: #{tpu_custom_call.1} parent=11 // pred_check_branch
          %490 = sbr.rel (%p488) target = $region36
        $region35: #{tpu_custom_call.1} parent=11 // pred_region
          _
        $region36: #{tpu_custom_call.1} parent=11 // pred_fallthru
          _
        // Predicated region
        $region37: #{tpu_custom_call.1} parent=11 // pred_check
          %p491 = pneg %p253
        $region38: #{tpu_custom_call.1} parent=11 // pred_check_branch
          %493 = sbr.rel (%p491) target = $region40
        $region39: #{tpu_custom_call.1} parent=11 // pred_region
          _
        $region40: #{tpu_custom_call.1} parent=11 // pred_fallthru
          _
        // Predicated region
        $region41: #{tpu_custom_call.1} parent=11 // pred_check
          %p494 = pneg %p274
        $region42: #{tpu_custom_call.1} parent=11 // pred_check_branch
          %496 = sbr.rel (%p494) target = $region44
        $region43: #{tpu_custom_call.1} parent=11 // pred_region
          _
        $region44: #{tpu_custom_call.1} parent=11 // pred_fallthru
          _
        // Predicated region
        $region45: #{tpu_custom_call.1} parent=11 // pred_check
          %p497 = pneg %p295
        $region46: #{tpu_custom_call.1} parent=11 // pred_check_branch
          %499 = sbr.rel (%p497) target = $region48
        $region47: #{tpu_custom_call.1} parent=11 // pred_region
          _
        $region48: #{tpu_custom_call.1} parent=11 // pred_fallthru
          _
        // Predicated region
        $region49: #{tpu_custom_call.1} parent=11 // pred_check
          %p500 = pneg %p316
        $region50: #{tpu_custom_call.1} parent=11 // pred_check_branch
          %502 = sbr.rel (%p500) target = $region52
        $region51: #{tpu_custom_call.1} parent=11 // pred_region
          _
        $region52: #{tpu_custom_call.1} parent=11 // pred_fallthru
          _
        // Predicated region
        $region53: #{tpu_custom_call.1} parent=11 // pred_check
          %p503 = pneg %p337
        $region54: #{tpu_custom_call.1} parent=11 // pred_check_branch
          %505 = sbr.rel (%p503) target = $region56
        $region55: #{tpu_custom_call.1} parent=11 // pred_region
          _
        $region56: #{tpu_custom_call.1} parent=11 // pred_fallthru
          _
        // Predicated region
        $region57: #{tpu_custom_call.1} parent=11 // pred_check
          %p506 = pneg %p358
        $region58: #{tpu_custom_call.1} parent=11 // pred_check_branch
          %508 = sbr.rel (%p506) target = $region60
        $region59: #{tpu_custom_call.1} parent=11 // pred_region
          _
        $region60: #{tpu_custom_call.1} parent=11 // pred_fallthru
          _
        // Predicated region
        $region61: #{tpu_custom_call.1} parent=11 // pred_check
          %p509 = pneg %p379
        $region62: #{tpu_custom_call.1} parent=11 // pred_check_branch
          %511 = sbr.rel (%p509) target = $region64
        $region63: #{tpu_custom_call.1} parent=11 // pred_region
          _
        $region64: #{tpu_custom_call.1} parent=11 // pred_fallthru
          _
        // Predicated region
        $region65: #{tpu_custom_call.1} parent=11 // pred_check
          %p512 = pneg %p400
        $region66: #{tpu_custom_call.1} parent=11 // pred_check_branch
          %514 = sbr.rel (%p512) target = $region68
        $region67: #{tpu_custom_call.1} parent=11 // pred_region
          _
        $region68: #{tpu_custom_call.1} parent=11 // pred_fallthru
          _
        // Predicated region
        $region69: #{tpu_custom_call.1} parent=11 // pred_check
          %p515 = pneg %p421
        $region70: #{tpu_custom_call.1} parent=11 // pred_check_branch
          %517 = sbr.rel (%p515) target = $region72
        $region71: #{tpu_custom_call.1} parent=11 // pred_region
          _
        $region72: #{tpu_custom_call.1} parent=11 // pred_fallthru
          _
      $region12: #{tpu_custom_call.1} parent=5 // pred_fallthru
        _
      %p518 = scmp.lt.s32.totalorder %s28, 2
      // Predicated region
      $region73: #{tpu_custom_call.1} parent=5 // pred_check
        %p519 = pneg %p518
      $region74: #{tpu_custom_call.1} parent=5 // pred_check_branch
        %521 = sbr.rel (%p519) target = $region76
      $region75: #{tpu_custom_call.1} parent=5 // pred_region
        // Predicated region
        $region77: #{tpu_custom_call.1} parent=75 // pred_check
          %p522 = pneg %p69
        $region78: #{tpu_custom_call.1} parent=75 // pred_check_branch
          %524 = sbr.rel (%p522) target = $region80
        $region79: #{tpu_custom_call.1} parent=75 // pred_region
          %p525 = scmp.lt.s32.totalorder %s28, 1
          %s526 = scalar_select %p525, %s28, 1
          %s527 = smul.addr %s526, 8
          %s528 = scalar_lea.vmem %s1, %s527
        $region80: #{tpu_custom_call.1} parent=75 // pred_fallthru
          _
        // Predicated region
        $region81: #{tpu_custom_call.1} parent=75 // pred_check
          %p529 = pneg %p95
        $region82: #{tpu_custom_call.1} parent=75 // pred_check_branch
          %531 = sbr.rel (%p529) target = $region84
        $region83: #{tpu_custom_call.1} parent=75 // pred_region
          %p532 = scmp.lt.s32.totalorder %s28, 1
          %s533 = scalar_select %p532, %s28, 1
          %s534 = smul.addr %s533, 8
          %s535 = scalar_lea.vmem %s2, %s534
        $region84: #{tpu_custom_call.1} parent=75 // pred_fallthru
          _
        // Predicated region
        $region85: #{tpu_custom_call.1} parent=75 // pred_check
          %p536 = pneg %p121
        $region86: #{tpu_custom_call.1} parent=75 // pred_check_branch
          %538 = sbr.rel (%p536) target = $region88
        $region87: #{tpu_custom_call.1} parent=75 // pred_region
          %p539 = scmp.lt.s32.totalorder %s28, 1
          %s540 = scalar_select %p539, %s28, 1
          %s541 = smul.addr %s540, 4
          %s542 = smul.addr %s541, 8
          %s543 = scalar_lea.vmem %s3, %s542
        $region88: #{tpu_custom_call.1} parent=75 // pred_fallthru
          _
      $region76: #{tpu_custom_call.1} parent=5 // pred_fallthru
        _
      %p544 = scmp.le.s32.totalorder 1, %s28
      %p545 = scmp.lt.s32.totalorder %s28, 3
      %p546 = pnand %p544, %p545
      %p547 = pneg %p546
      // Predicated region
      $region89: #{tpu_custom_call.1} parent=5 // pred_check
        _
      $region90: #{tpu_custom_call.1} parent=5 // pred_check_branch
        %549 = sbr.rel (%p546) target = $region92
      $region91: #{tpu_custom_call.1} parent=5 // pred_region
        %s550 = ssub.s32 %s28, 1
        // Predicated region
        $region93: #{tpu_custom_call.1} parent=91 // pred_check
          %p551 = pneg %p211
        $region94: #{tpu_custom_call.1} parent=91 // pred_check_branch
          %553 = sbr.rel (%p551) target = $region96
        $region95: #{tpu_custom_call.1} parent=91 // pred_region
          %555 = dma.done [#allocation3], 768
        $region96: #{tpu_custom_call.1} parent=91 // pred_fallthru
          _
        %p556 = pneg %p49
        %p557 = pneg %p46
        %p558 = scmp.lt.s32.totalorder %s33, 1
        %s559 = scalar_select %p558, %s33, 1
        %s560 = smul.addr %s559, 8
        %s561 = scalar_lea.vmem %s1, %s560
        %p562 = pneg %p75
        %p563 = pneg %p72
        %p564 = scmp.lt.s32.totalorder %s33, 1
        %s565 = scalar_select %p564, %s33, 1
        %s566 = smul.addr %s565, 8
        %s567 = scalar_lea.vmem %s2, %s566
        %p568 = pneg %p101
        %p569 = pneg %p98
        %p570 = scmp.lt.s32.totalorder %s33, 1
        %s571 = scalar_select %p570, %s33, 1
        %s572 = smul.addr %s571, 4
        %s573 = smul.addr %s572, 8
        %s574 = scalar_lea.vmem %s3, %s573
        %p575 = pneg %p127
        %p576 = pneg %p124
        %p577 = pneg %p148
        %p578 = pneg %p145
        %p579 = pneg %p169
        %p580 = pneg %p166
        %p581 = pneg %p190
        %p582 = pneg %p187
        %p583 = pneg %p211
        %p584 = pneg %p208
        %p585 = pneg %p232
        %p586 = pneg %p229
        %p587 = pneg %p253
        %p588 = pneg %p250
        %p589 = pneg %p274
        %p590 = pneg %p271
        %p591 = pneg %p295
        %p592 = pneg %p292
        %p593 = pneg %p316
        %p594 = pneg %p313
        %p595 = pneg %p337
        %p596 = pneg %p334
        %p597 = pneg %p358
        %p598 = pneg %p355
        %p599 = pneg %p379
        %p600 = pneg %p376
        %p601 = pneg %p400
        %p602 = pneg %p397
        %p603 = pneg %p421
        %p604 = pneg %p418
        %p605 = pneg %p447
        %p606 = pneg %p444
        %s607 = sand.u32 %s434, 1
        %s608 = scalar_lea.sflag [#allocation4], %s607
        %s609 = sand.u32 %s434, 1
        %s610 = smul.addr %s609, 8
        %s611 = scalar_lea.vmem [#allocation5], %s610
        %p612 = scmp.lt.s32.totalorder %s33, 1
        %s613 = scalar_select %p612, %s33, 1
        %s614 = smul.addr %s613, 8
        %s615 = scalar_lea.vmem %s1, %s614
        %p616 = scmp.lt.s32.totalorder %s33, 1
        %s617 = scalar_select %p616, %s33, 1
        %s618 = smul.addr %s617, 8
        %s619 = scalar_lea.vmem %s2, %s618
        %p620 = scmp.lt.s32.totalorder %s33, 1
        %s621 = scalar_select %p620, %s33, 1
        %s622 = smul.addr %s621, 4
        %s623 = smul.addr %s622, 8
        %s624 = scalar_lea.vmem %s3, %s623
        %v625 = vld [vmem:[%s615] sm:$0xff]
        %v626 = vld [vmem:[%s0] sm:$0xff]
        %vm627 = vcmask 64512
        %v629 = vsel %vm627, %v625, 0
        %631 = vmatpush.msra.mxu0 0.0
        %632 = vmatpush.msra.mxu0 0.0
        %633 = vmatpush.msra.mxu0 0.0
        %634 = vmatpush.msra.mxu0 0.0
        %635 = vmatpush.msra.mxu0 0.0
        %636 = vmatpush.msra.mxu0 0.0
        %637 = vmatpush.msra.mxu0 0.0
        %638 = vmatpush.msra.mxu0 0.0
        %639 = vmatpush.msra.mxu0 0.0
        %640 = vmatpush.msra.mxu0 0.0
        %641 = vmatpush.msra.mxu0 0.0
        %642 = vmatpush.msra.mxu0 0.0
        %643 = vmatpush.msra.mxu0 0.0
        %644 = vmatpush.msra.mxu0 0.0
        %645 = vmatpush.msra.mxu0 0.0
        %646 = vmatpush.msra.mxu0 %v626
        %647 = vmatmul.f32.gmra.mxu0 %v629
        %v648 = vpop.f32.mrf.mxu0
        %v649 = vadd.f32 0.0, %v648
        %650 = vdwg.mxu0
        %v651 = vld [vmem:[%s619] sm:$0xff]
        %654 = vrot.lane.b32.xlu0 %v651, 1
        %v655 = vpop.permute.xlu0 %654
        %656 = vrot.lane.b32.xlu0 %v649, 1
        %v657 = vpop.permute.xlu0 %656
        %vm660 = vcmask 7168
        %v661 = vsel %vm660, 0.0, %v655
        %v662 = vsel %vm660, 0.0, %v657
        %vm663 = vcmask 138240
        %v664 = vsel %vm663, %v661, 0.0
        %v665 = vsel %vm663, %v662, 0.0
        %v666 = vld [vmem:[%s4] sm:$0xff]
        %v667 = vld [vmem:[%s4 + $0x8] sm:$0xff]
        %s668 = scalar_lea.vmem %s4, 16
        %v669 = vld [vmem:[%s668] sm:$0xff]
        %v670 = vld [vmem:[%s668 + $0x8] sm:$0xff]
        %673 = vrot.lane.b32.xlu0 %v664, 127
        %v674 = vpop.permute.xlu0 %673
        %675 = vrot.lane.b32.xlu0 %v665, 127
        %v676 = vpop.permute.xlu0 %675
        %vm679 = vcmask 130048
        %v681 = vsel %vm679, %v669, 0
        %v684 = vsel %vm679, %v670, 0
        %686 = vmatpush.msra.mxu0 0.0
        %687 = vmatpush.msra.mxu0 0.0
        %688 = vmatpush.msra.mxu0 0.0
        %689 = vmatpush.msra.mxu0 0.0
        %690 = vmatpush.msra.mxu0 0.0
        %691 = vmatpush.msra.mxu0 0.0
        %692 = vmatpush.msra.mxu0 0.0
        %693 = vmatpush.msra.mxu0 0.0
        %694 = vmatpush.msra.mxu0 0.0
        %695 = vmatpush.msra.mxu0 0.0
        %696 = vmatpush.msra.mxu0 0.0
        %697 = vmatpush.msra.mxu0 0.0
        %698 = vmatpush.msra.mxu0 0.0
        %699 = vmatpush.msra.mxu0 0.0
        %700 = vmatpush.msra.mxu0 %v676
        %701 = vmatpush.msra.mxu0 %v674
        %702 = vmatmul.f32.gmra.mxu0 %v681
        %v703 = vpop.f32.mrf.mxu0
        %v704 = vadd.f32 0.0, %v703
        %705 = vmatmul.f32.gmra.mxu0 %v684
        %v706 = vpop.f32.mrf.mxu0
        %v707 = vadd.f32 0.0, %v706
        %708 = vdwg.mxu0
        %v710 = vsel %vm679, %v666, 0
        %v713 = vsel %vm679, %v667, 0
        %715 = vmatpush.msra.mxu0 0.0
        %716 = vmatpush.msra.mxu0 0.0
        %717 = vmatpush.msra.mxu0 0.0
        %718 = vmatpush.msra.mxu0 0.0
        %719 = vmatpush.msra.mxu0 0.0
        %720 = vmatpush.msra.mxu0 0.0
        %721 = vmatpush.msra.mxu0 0.0
        %722 = vmatpush.msra.mxu0 0.0
        %723 = vmatpush.msra.mxu0 0.0
        %724 = vmatpush.msra.mxu0 0.0
        %725 = vmatpush.msra.mxu0 0.0
        %726 = vmatpush.msra.mxu0 0.0
        %727 = vmatpush.msra.mxu0 0.0
        %728 = vmatpush.msra.mxu0 0.0
        %729 = vmatpush.msra.mxu0 %v665
        %730 = vmatpush.msra.mxu0 %v664
        %731 = vmatmul.f32.gmra.mxu0 %v710
        %v732 = vpop.f32.mrf.mxu0
        %v733 = vadd.f32 %v704, %v732
        %734 = vmatmul.f32.gmra.mxu0 %v713
        %v735 = vpop.f32.mrf.mxu0
        %v736 = vadd.f32 %v707, %v735
        %737 = vdwg.mxu0
        %s738 = scalar_lea.vmem %s4, 32
        %v739 = vld [vmem:[%s738] sm:$0xff]
        %v740 = vld [vmem:[%s738 + $0x8] sm:$0xff]
        %741 = vrot.lane.b32.xlu0 %v664, 126
        %v742 = vpop.permute.xlu0 %741
        %743 = vrot.lane.b32.xlu0 %v665, 126
        %v744 = vpop.permute.xlu0 %743
        %v748 = vsel %vm679, %v739, 0
        %v751 = vsel %vm679, %v740, 0
        %753 = vmatpush.msra.mxu0 0.0
        %754 = vmatpush.msra.mxu0 0.0
        %755 = vmatpush.msra.mxu0 0.0
        %756 = vmatpush.msra.mxu0 0.0
        %757 = vmatpush.msra.mxu0 0.0
        %758 = vmatpush.msra.mxu0 0.0
        %759 = vmatpush.msra.mxu0 0.0
        %760 = vmatpush.msra.mxu0 0.0
        %761 = vmatpush.msra.mxu0 0.0
        %762 = vmatpush.msra.mxu0 0.0
        %763 = vmatpush.msra.mxu0 0.0
        %764 = vmatpush.msra.mxu0 0.0
        %765 = vmatpush.msra.mxu0 0.0
        %766 = vmatpush.msra.mxu0 0.0
        %767 = vmatpush.msra.mxu0 %v744
        %768 = vmatpush.msra.mxu0 %v742
        %769 = vmatmul.f32.gmra.mxu0 %v748
        %v770 = vpop.f32.mrf.mxu0
        %v771 = vadd.f32 0.0, %v770
        %772 = vmatmul.f32.gmra.mxu0 %v751
        %v773 = vpop.f32.mrf.mxu0
        %v774 = vadd.f32 0.0, %v773
        %775 = vdwg.mxu0
        %v776 = vadd.f32 %v733, %v771
        %v777 = vadd.f32 %v736, %v774
        %v778 = vsel %vm679, %v776, 0.0
        %779 = vadd.xlane.f32.xlu0 %v778
        %v780 = vpop.xlane.xlu0 %779
        %v781 = vsel %vm679, %v777, 0.0
        %782 = vadd.xlane.f32.xlu0 %v781
        %v783 = vpop.xlane.xlu0 %782
        %v784 = vadd.f32 %v780, %v783
        %v785 = vrot.slane %v784, 4
        %v786 = vadd.f32 %v784, %v785
        %v787 = vrot.slane %v786, 2
        %v788 = vadd.f32 %v786, %v787
        %v789 = vrot.slane %v788, 1
        %v790 = vadd.f32 %v788, %v789
        %v791 = vmul.f32 %v790, 0.00390625
        %v792 = vsub.f32 %v776, %v791
        %v793 = vsub.f32 %v777, %v791
        %v794 = vmul.f32 %v792, %v792
        %v795 = vmul.f32 %v793, %v793
        %v796 = vsel %vm679, %v794, 0.0
        %797 = vadd.xlane.f32.xlu0 %v796
        %v798 = vpop.xlane.xlu0 %797
        %v799 = vsel %vm679, %v795, 0.0
        %800 = vadd.xlane.f32.xlu0 %v799
        %v801 = vpop.xlane.xlu0 %800
        %v802 = vadd.f32 %v798, %v801
        %v803 = vrot.slane %v802, 4
        %v804 = vadd.f32 %v802, %v803
        %v805 = vrot.slane %v804, 2
        %v806 = vadd.f32 %v804, %v805
        %v807 = vrot.slane %v806, 1
        %v808 = vadd.f32 %v806, %v807
        %v809 = vmul.f32 %v808, 0.00390625
        %v810 = vadd.f32 %v809, 1e-05
        %v811 = vrsqrt.pop %v810
        %v812 = vmul.f32 %v811, %v810
        %v813 = vmul.f32 %v812, %v811
        %v814 = vmul.f32 0.5, %v813
        %v815 = vsub.f32 1.5, %v814
        %v816 = vmul.f32 %v811, %v815
        %vm817 = vweird.f32 %v810
        %vm818 = vweird.f32 %v811
        %vm819 = vmor %vm817, %vm818
        %v820 = vsel %vm819, %v811, %v816
        %v821 = vmul.f32 %v792, %v820
        %v822 = vmul.f32 %v793, %v820
        %v823 = vld [vmem:[%s5] sm:$0xff]
        %v824 = vld [vmem:[%s5 + $0x8] sm:$0xff]
        %826 = vset.pattern.permute.xlu0 0
        %827 = vperm.xlu0 %826, %v823
        %v828 = vpop.permute.xlu0 %827
        %831 = vset.pattern.permute.xlu0 0
        %832 = vperm.xlu0 %831, %v824
        %v833 = vpop.permute.xlu0 %832
        %v835 = vmul.f32 %v821, %v828
        %v836 = vmul.f32 %v822, %v833
        %v837 = vld [vmem:[%s6] sm:$0xff]
        %v838 = vld [vmem:[%s6 + $0x8] sm:$0xff]
        %840 = vset.pattern.permute.xlu0 0
        %841 = vperm.xlu0 %840, %v837
        %v842 = vpop.permute.xlu0 %841
        %845 = vset.pattern.permute.xlu0 0
        %846 = vperm.xlu0 %845, %v838
        %v847 = vpop.permute.xlu0 %846
        %v849 = vadd.f32 %v835, %v842
        %v850 = vadd.f32 %v836, %v847
        %v851 = vmul.f32 %v849, 0.5
        %v852 = vmul.f32 %v850, 0.5
        %v853 = vmul.f32 %v849, 0.70710677
        %v854 = vmul.f32 %v850, 0.70710677
        %v855 = vand.u32 2147483647, %v853
        %v856 = vand.u32 2147483647, %v854
        %v857 = vmul.f32 %v855, 0.3275911
        %v858 = vmul.f32 %v856, 0.3275911
        %v859 = vadd.f32 %v857, 1.0
        %v860 = vadd.f32 %v858, 1.0
        %v861 = vrcp.pop %v859
        %v862 = vmul.f32 %v859, %v861
        %v863 = vsub.f32 1.0, %v862
        %v864 = vmul.f32 %v861, %v863
        %v865 = vadd.f32 %v861, %v864
        %vm866 = vweird.f32 %v859
        %vm867 = vweird.f32 %v861
        %vm868 = vmor %vm866, %vm867
        %v869 = vsel %vm868, %v861, %v865
        %v870 = vand.u32 2147483647, %v859
        %vm871 = vcmp.eq.f32.partialorder %v870, 8.507059e+37
        %v872 = vand.u32 %v859, 2147483648
        %v873 = vor.u32 1.1754944e-38, %v872
        %v874 = vsel %vm871, %v873, %v869
        %v875 = vmul.f32 1.0, %v874
        %v876 = vrcp.pop %v860
        %v877 = vmul.f32 %v860, %v876
        %v878 = vsub.f32 1.0, %v877
        %v879 = vmul.f32 %v876, %v878
        %v880 = vadd.f32 %v876, %v879
        %vm881 = vweird.f32 %v860
        %vm882 = vweird.f32 %v876
        %vm883 = vmor %vm881, %vm882
        %v884 = vsel %vm883, %v876, %v880
        %v885 = vand.u32 2147483647, %v860
        %vm886 = vcmp.eq.f32.partialorder %v885, 8.507059e+37
        %v887 = vand.u32 %v860, 2147483648
        %v888 = vor.u32 1.1754944e-38, %v887
        %v889 = vsel %vm886, %v888, %v884
        %v890 = vmul.f32 1.0, %v889
        %v891 = vmul.f32 %v875, 1.0614054
        %v892 = vmul.f32 %v890, 1.0614054
        %v893 = vadd.f32 %v891, -1.4531521
        %v894 = vadd.f32 %v892, -1.4531521
        %v895 = vmul.f32 %v893, %v875
        %v896 = vmul.f32 %v894, %v890
        %v897 = vadd.f32 %v895, 1.4214138
        %v898 = vadd.f32 %v896, 1.4214138
        %v899 = vmul.f32 %v897, %v875
        %v900 = vmul.f32 %v898, %v890
        %v901 = vadd.f32 %v899, -0.28449672
        %v902 = vadd.f32 %v900, -0.28449672
        %v903 = vmul.f32 %v901, %v875
        %v904 = vmul.f32 %v902, %v890
        %v905 = vadd.f32 %v903, 0.2548296
        %v906 = vadd.f32 %v904, 0.2548296
        %v907 = vmul.f32 %v905, %v875
        %v908 = vmul.f32 %v906, %v890
        %v909 = vmul.f32 %v855, %v855
        %v910 = vmul.f32 %v856, %v856
        %v911 = vsub.f32 0.0, %v909
        %v912 = vsub.f32 0.0, %v910
        %v913 = vmul.f32 %v911, 1.442695
        %v914 = vpow.pop %v913
        %v915 = vmul.f32 %v912, 1.442695
        %v916 = vpow.pop %v915
        %v917 = vmul.f32 %v907, %v914
        %v918 = vmul.f32 %v908, %v916
        %v919 = vsub.f32 1.0, %v917
        %v920 = vsub.f32 1.0, %v918
        %vm921 = vcmp.lt.f32.partialorder %v853, 0.0
        %vm922 = vcmp.lt.f32.partialorder %v854, 0.0
        %v923 = vsub.f32 0.0, %v919
        %v924 = vsub.f32 0.0, %v920
        %v925 = vsel %vm921, %v923, %v919
        %v926 = vsel %vm922, %v924, %v920
        %v927 = vadd.f32 %v925, 1.0
        %v928 = vadd.f32 %v926, 1.0
        %v929 = vmul.f32 %v851, %v927
        %v930 = vmul.f32 %v852, %v928
        %933 = vrot.lane.b32.xlu0 %v929, 1
        %v934 = vpop.permute.xlu0 %933
        %935 = vrot.lane.b32.xlu0 %v930, 1
        %v936 = vpop.permute.xlu0 %935
        %v939 = vsel %vm660, 0.0, %v934
        %v940 = vsel %vm660, 0.0, %v936
        %v941 = vsel %vm663, %v939, 0.0
        %v942 = vsel %vm663, %v940, 0.0
        %v943 = vld [vmem:[#allocation2] sm:$0xff]
        %v944 = vld [vmem:[#allocation2 + $0x8] sm:$0xff]
        %s945 = scalar_lea.vmem [#allocation2], 16
        %v946 = vld [vmem:[%s945] sm:$0xff]
        %v947 = vld [vmem:[%s945 + $0x8] sm:$0xff]
        %950 = vrot.lane.b32.xlu0 %v941, 127
        %v951 = vpop.permute.xlu0 %950
        %952 = vrot.lane.b32.xlu0 %v942, 127
        %v953 = vpop.permute.xlu0 %952
        %v957 = vsel %vm679, %v946, 0
        %v960 = vsel %vm679, %v947, 0
        %962 = vmatpush.msra.mxu0 0.0
        %963 = vmatpush.msra.mxu0 0.0
        %964 = vmatpush.msra.mxu0 0.0
        %965 = vmatpush.msra.mxu0 0.0
        %966 = vmatpush.msra.mxu0 0.0
        %967 = vmatpush.msra.mxu0 0.0
        %968 = vmatpush.msra.mxu0 0.0
        %969 = vmatpush.msra.mxu0 0.0
        %970 = vmatpush.msra.mxu0 0.0
        %971 = vmatpush.msra.mxu0 0.0
        %972 = vmatpush.msra.mxu0 0.0
        %973 = vmatpush.msra.mxu0 0.0
        %974 = vmatpush.msra.mxu0 0.0
        %975 = vmatpush.msra.mxu0 0.0
        %976 = vmatpush.msra.mxu0 %v953
        %977 = vmatpush.msra.mxu0 %v951
        %978 = vmatmul.f32.gmra.mxu0 %v957
        %v979 = vpop.f32.mrf.mxu0
        %v980 = vadd.f32 0.0, %v979
        %981 = vmatmul.f32.gmra.mxu0 %v960
        %v982 = vpop.f32.mrf.mxu0
        %v983 = vadd.f32 0.0, %v982
        %984 = vdwg.mxu0
        %v986 = vsel %vm679, %v943, 0
        %v989 = vsel %vm679, %v944, 0
        %991 = vmatpush.msra.mxu0 0.0
        %992 = vmatpush.msra.mxu0 0.0
        %993 = vmatpush.msra.mxu0 0.0
        %994 = vmatpush.msra.mxu0 0.0
        %995 = vmatpush.msra.mxu0 0.0
        %996 = vmatpush.msra.mxu0 0.0
        %997 = vmatpush.msra.mxu0 0.0
        %998 = vmatpush.msra.mxu0 0.0
        %999 = vmatpush.msra.mxu0 0.0
        %1000 = vmatpush.msra.mxu0 0.0
        %1001 = vmatpush.msra.mxu0 0.0
        %1002 = vmatpush.msra.mxu0 0.0
        %1003 = vmatpush.msra.mxu0 0.0
        %1004 = vmatpush.msra.mxu0 0.0
        %1005 = vmatpush.msra.mxu0 %v942
        %1006 = vmatpush.msra.mxu0 %v941
        %1007 = vmatmul.f32.gmra.mxu0 %v986
        %v1008 = vpop.f32.mrf.mxu0
        %v1009 = vadd.f32 %v980, %v1008
        %1010 = vmatmul.f32.gmra.mxu0 %v989
        %v1011 = vpop.f32.mrf.mxu0
        %v1012 = vadd.f32 %v983, %v1011
        %1013 = vdwg.mxu0
        %s1014 = scalar_lea.vmem [#allocation2], 32
        %v1015 = vld [vmem:[%s1014] sm:$0xff]
        %v1016 = vld [vmem:[%s1014 + $0x8] sm:$0xff]
        %1017 = vrot.lane.b32.xlu0 %v941, 126
        %v1018 = vpop.permute.xlu0 %1017
        %1019 = vrot.lane.b32.xlu0 %v942, 126
        %v1020 = vpop.permute.xlu0 %1019
        %v1024 = vsel %vm679, %v1015, 0
        %v1027 = vsel %vm679, %v1016, 0
        %1029 = vmatpush.msra.mxu0 0.0
        %1030 = vmatpush.msra.mxu0 0.0
        %1031 = vmatpush.msra.mxu0 0.0
        %1032 = vmatpush.msra.mxu0 0.0
        %1033 = vmatpush.msra.mxu0 0.0
        %1034 = vmatpush.msra.mxu0 0.0
        %1035 = vmatpush.msra.mxu0 0.0
        %1036 = vmatpush.msra.mxu0 0.0
        %1037 = vmatpush.msra.mxu0 0.0
        %1038 = vmatpush.msra.mxu0 0.0
        %1039 = vmatpush.msra.mxu0 0.0
        %1040 = vmatpush.msra.mxu0 0.0
        %1041 = vmatpush.msra.mxu0 0.0
        %1042 = vmatpush.msra.mxu0 0.0
        %1043 = vmatpush.msra.mxu0 %v1020
        %1044 = vmatpush.msra.mxu0 %v1018
        %1045 = vmatmul.f32.gmra.mxu0 %v1024
        %v1046 = vpop.f32.mrf.mxu0
        %v1047 = vadd.f32 0.0, %v1046
        %1048 = vmatmul.f32.gmra.mxu0 %v1027
        %v1049 = vpop.f32.mrf.mxu0
        %v1050 = vadd.f32 0.0, %v1049
        %1051 = vdwg.mxu0
        %v1052 = vadd.f32 %v1009, %v1047
        %v1053 = vadd.f32 %v1012, %v1050
        %v1054 = vsel %vm679, %v1052, 0.0
        %1055 = vadd.xlane.f32.xlu0 %v1054
        %v1056 = vpop.xlane.xlu0 %1055
        %v1057 = vsel %vm679, %v1053, 0.0
        %1058 = vadd.xlane.f32.xlu0 %v1057
        %v1059 = vpop.xlane.xlu0 %1058
        %v1060 = vadd.f32 %v1056, %v1059
        %v1061 = vrot.slane %v1060, 4
        %v1062 = vadd.f32 %v1060, %v1061
        %v1063 = vrot.slane %v1062, 2
        %v1064 = vadd.f32 %v1062, %v1063
        %v1065 = vrot.slane %v1064, 1
        %v1066 = vadd.f32 %v1064, %v1065
        %v1067 = vmul.f32 %v1066, 0.00390625
        %v1068 = vsub.f32 %v1052, %v1067
        %v1069 = vsub.f32 %v1053, %v1067
        %v1070 = vmul.f32 %v1068, %v1068
        %v1071 = vmul.f32 %v1069, %v1069
        %v1072 = vsel %vm679, %v1070, 0.0
        %1073 = vadd.xlane.f32.xlu0 %v1072
        %v1074 = vpop.xlane.xlu0 %1073
        %v1075 = vsel %vm679, %v1071, 0.0
        %1076 = vadd.xlane.f32.xlu0 %v1075
        %v1077 = vpop.xlane.xlu0 %1076
        %v1078 = vadd.f32 %v1074, %v1077
        %v1079 = vrot.slane %v1078, 4
        %v1080 = vadd.f32 %v1078, %v1079
        %v1081 = vrot.slane %v1080, 2
        %v1082 = vadd.f32 %v1080, %v1081
        %v1083 = vrot.slane %v1082, 1
        %v1084 = vadd.f32 %v1082, %v1083
        %v1085 = vmul.f32 %v1084, 0.00390625
        %v1086 = vadd.f32 %v1085, 1e-05
        %v1087 = vrsqrt.pop %v1086
        %v1088 = vmul.f32 %v1087, %v1086
        %v1089 = vmul.f32 %v1088, %v1087
        %v1090 = vmul.f32 0.5, %v1089
        %v1091 = vsub.f32 1.5, %v1090
        %v1092 = vmul.f32 %v1087, %v1091
        %vm1093 = vweird.f32 %v1086
        %vm1094 = vweird.f32 %v1087
        %vm1095 = vmor %vm1093, %vm1094
        %v1096 = vsel %vm1095, %v1087, %v1092
        %v1097 = vmul.f32 %v1068, %v1096
        %v1098 = vmul.f32 %v1069, %v1096
        %v1099 = vld [vmem:[%s8] sm:$0xff]
        %v1100 = vld [vmem:[%s8 + $0x8] sm:$0xff]
        %1102 = vset.pattern.permute.xlu0 0
        %1103 = vperm.xlu0 %1102, %v1099
        %v1104 = vpop.permute.xlu0 %1103
        %1107 = vset.pattern.permute.xlu0 0
        %1108 = vperm.xlu0 %1107, %v1100
        %v1109 = vpop.permute.xlu0 %1108
        %v1111 = vmul.f32 %v1097, %v1104
        %v1112 = vmul.f32 %v1098, %v1109
        %v1113 = vld [vmem:[%s9] sm:$0xff]
        %v1114 = vld [vmem:[%s9 + $0x8] sm:$0xff]
        %1116 = vset.pattern.permute.xlu0 0
        %1117 = vperm.xlu0 %1116, %v1113
        %v1118 = vpop.permute.xlu0 %1117
        %1121 = vset.pattern.permute.xlu0 0
        %1122 = vperm.xlu0 %1121, %v1114
        %v1123 = vpop.permute.xlu0 %1122
        %v1125 = vadd.f32 %v1111, %v1118
        %v1126 = vadd.f32 %v1112, %v1123
        %v1127 = vadd.f32 %v651, %v1125
        %v1128 = vadd.f32 %v649, %v1126
        %v1129 = vmul.f32 %v1127, 0.5
        %v1130 = vmul.f32 %v1128, 0.5
        %v1131 = vmul.f32 %v1127, 0.70710677
        %v1132 = vmul.f32 %v1128, 0.70710677
        %v1133 = vand.u32 2147483647, %v1131
        %v1134 = vand.u32 2147483647, %v1132
        %v1135 = vmul.f32 %v1133, 0.3275911
        %v1136 = vmul.f32 %v1134, 0.3275911
        %v1137 = vadd.f32 %v1135, 1.0
        %v1138 = vadd.f32 %v1136, 1.0
        %v1139 = vrcp.pop %v1137
        %v1140 = vmul.f32 %v1137, %v1139
        %v1141 = vsub.f32 1.0, %v1140
        %v1142 = vmul.f32 %v1139, %v1141
        %v1143 = vadd.f32 %v1139, %v1142
        %vm1144 = vweird.f32 %v1137
        %vm1145 = vweird.f32 %v1139
        %vm1146 = vmor %vm1144, %vm1145
        %v1147 = vsel %vm1146, %v1139, %v1143
        %v1148 = vand.u32 2147483647, %v1137
        %vm1149 = vcmp.eq.f32.partialorder %v1148, 8.507059e+37
        %v1150 = vand.u32 %v1137, 2147483648
        %v1151 = vor.u32 1.1754944e-38, %v1150
        %v1152 = vsel %vm1149, %v1151, %v1147
        %v1153 = vmul.f32 1.0, %v1152
        %v1154 = vrcp.pop %v1138
        %v1155 = vmul.f32 %v1138, %v1154
        %v1156 = vsub.f32 1.0, %v1155
        %v1157 = vmul.f32 %v1154, %v1156
        %v1158 = vadd.f32 %v1154, %v1157
        %vm1159 = vweird.f32 %v1138
        %vm1160 = vweird.f32 %v1154
        %vm1161 = vmor %vm1159, %vm1160
        %v1162 = vsel %vm1161, %v1154, %v1158
        %v1163 = vand.u32 2147483647, %v1138
        %vm1164 = vcmp.eq.f32.partialorder %v1163, 8.507059e+37
        %v1165 = vand.u32 %v1138, 2147483648
        %v1166 = vor.u32 1.1754944e-38, %v1165
        %v1167 = vsel %vm1164, %v1166, %v1162
        %v1168 = vmul.f32 1.0, %v1167
        %v1169 = vmul.f32 %v1153, 1.0614054
        %v1170 = vmul.f32 %v1168, 1.0614054
        %v1171 = vadd.f32 %v1169, -1.4531521
        %v1172 = vadd.f32 %v1170, -1.4531521
        %v1173 = vmul.f32 %v1171, %v1153
        %v1174 = vmul.f32 %v1172, %v1168
        %v1175 = vadd.f32 %v1173, 1.4214138
        %v1176 = vadd.f32 %v1174, 1.4214138
        %v1177 = vmul.f32 %v1175, %v1153
        %v1178 = vmul.f32 %v1176, %v1168
        %v1179 = vadd.f32 %v1177, -0.28449672
        %v1180 = vadd.f32 %v1178, -0.28449672
        %v1181 = vmul.f32 %v1179, %v1153
        %v1182 = vmul.f32 %v1180, %v1168
        %v1183 = vadd.f32 %v1181, 0.2548296
        %v1184 = vadd.f32 %v1182, 0.2548296
        %v1185 = vmul.f32 %v1183, %v1153
        %v1186 = vmul.f32 %v1184, %v1168
        %v1187 = vmul.f32 %v1133, %v1133
        %v1188 = vmul.f32 %v1134, %v1134
        %v1189 = vsub.f32 0.0, %v1187
        %v1190 = vsub.f32 0.0, %v1188
        %v1191 = vmul.f32 %v1189, 1.442695
        %v1192 = vpow.pop %v1191
        %v1193 = vmul.f32 %v1190, 1.442695
        %v1194 = vpow.pop %v1193
        %v1195 = vmul.f32 %v1185, %v1192
        %v1196 = vmul.f32 %v1186, %v1194
        %v1197 = vsub.f32 1.0, %v1195
        %v1198 = vsub.f32 1.0, %v1196
        %vm1199 = vcmp.lt.f32.partialorder %v1131, 0.0
        %vm1200 = vcmp.lt.f32.partialorder %v1132, 0.0
        %v1201 = vsub.f32 0.0, %v1197
        %v1202 = vsub.f32 0.0, %v1198
        %v1203 = vsel %vm1199, %v1201, %v1197
        %v1204 = vsel %vm1200, %v1202, %v1198
        %v1205 = vadd.f32 %v1203, 1.0
        %v1206 = vadd.f32 %v1204, 1.0
        %v1207 = vmul.f32 %v1129, %v1205
        %v1208 = vmul.f32 %v1130, %v1206
        %1211 = vrot.lane.b32.xlu0 %v1207, 1
        %v1212 = vpop.permute.xlu0 %1211
        %1213 = vrot.lane.b32.xlu0 %v1208, 1
        %v1214 = vpop.permute.xlu0 %1213
        %v1217 = vsel %vm660, 0.0, %v1212
        %v1218 = vsel %vm660, 0.0, %v1214
        %v1219 = vsel %vm663, %v1217, 0.0
        %v1220 = vsel %vm663, %v1218, 0.0
        %v1221 = vld [vmem:[%s10] sm:$0xff]
        %s1222 = scalar_lea.vmem %s10, 8
        %v1223 = vld [vmem:[%s1222] sm:$0xff]
        %1226 = vrot.lane.b32.xlu0 %v1219, 127
        %v1227 = vpop.permute.xlu0 %1226
        %1228 = vrot.lane.b32.xlu0 %v1220, 127
        %v1229 = vpop.permute.xlu0 %1228
        %v1233 = vsel %vm679, %v1223, 0
        %1235 = vmatpush.msra.mxu0 0.0
        %1236 = vmatpush.msra.mxu0 0.0
        %1237 = vmatpush.msra.mxu0 0.0
        %1238 = vmatpush.msra.mxu0 0.0
        %1239 = vmatpush.msra.mxu0 0.0
        %1240 = vmatpush.msra.mxu0 0.0
        %1241 = vmatpush.msra.mxu0 0.0
        %1242 = vmatpush.msra.mxu0 0.0
        %1243 = vmatpush.msra.mxu0 0.0
        %1244 = vmatpush.msra.mxu0 0.0
        %1245 = vmatpush.msra.mxu0 0.0
        %1246 = vmatpush.msra.mxu0 0.0
        %1247 = vmatpush.msra.mxu0 0.0
        %1248 = vmatpush.msra.mxu0 0.0
        %1249 = vmatpush.msra.mxu0 %v1229
        %1250 = vmatpush.msra.mxu0 %v1227
        %1251 = vmatmul.f32.gmra.mxu0 %v1233
        %v1252 = vpop.f32.mrf.mxu0
        %v1253 = vadd.f32 0.0, %v1252
        %1254 = vdwg.mxu0
        %v1256 = vsel %vm679, %v1221, 0
        %1258 = vmatpush.msra.mxu0 0.0
        %1259 = vmatpush.msra.mxu0 0.0
        %1260 = vmatpush.msra.mxu0 0.0
        %1261 = vmatpush.msra.mxu0 0.0
        %1262 = vmatpush.msra.mxu0 0.0
        %1263 = vmatpush.msra.mxu0 0.0
        %1264 = vmatpush.msra.mxu0 0.0
        %1265 = vmatpush.msra.mxu0 0.0
        %1266 = vmatpush.msra.mxu0 0.0
        %1267 = vmatpush.msra.mxu0 0.0
        %1268 = vmatpush.msra.mxu0 0.0
        %1269 = vmatpush.msra.mxu0 0.0
        %1270 = vmatpush.msra.mxu0 0.0
        %1271 = vmatpush.msra.mxu0 0.0
        %1272 = vmatpush.msra.mxu0 %v1220
        %1273 = vmatpush.msra.mxu0 %v1219
        %1274 = vmatmul.f32.gmra.mxu0 %v1256
        %v1275 = vpop.f32.mrf.mxu0
        %v1276 = vadd.f32 %v1253, %v1275
        %1277 = vdwg.mxu0
        %s1278 = scalar_lea.vmem %s10, 16
        %v1279 = vld [vmem:[%s1278] sm:$0xff]
        %1280 = vrot.lane.b32.xlu0 %v1219, 126
        %v1281 = vpop.permute.xlu0 %1280
        %1282 = vrot.lane.b32.xlu0 %v1220, 126
        %v1283 = vpop.permute.xlu0 %1282
        %v1287 = vsel %vm679, %v1279, 0
        %1289 = vmatpush.msra.mxu0 0.0
        %1290 = vmatpush.msra.mxu0 0.0
        %1291 = vmatpush.msra.mxu0 0.0
        %1292 = vmatpush.msra.mxu0 0.0
        %1293 = vmatpush.msra.mxu0 0.0
        %1294 = vmatpush.msra.mxu0 0.0
        %1295 = vmatpush.msra.mxu0 0.0
        %1296 = vmatpush.msra.mxu0 0.0
        %1297 = vmatpush.msra.mxu0 0.0
        %1298 = vmatpush.msra.mxu0 0.0
        %1299 = vmatpush.msra.mxu0 0.0
        %1300 = vmatpush.msra.mxu0 0.0
        %1301 = vmatpush.msra.mxu0 0.0
        %1302 = vmatpush.msra.mxu0 0.0
        %1303 = vmatpush.msra.mxu0 %v1283
        %1304 = vmatpush.msra.mxu0 %v1281
        %1305 = vmatmul.f32.gmra.mxu0 %v1287
        %v1306 = vpop.f32.mrf.mxu0
        %v1307 = vadd.f32 0.0, %v1306
        %1308 = vdwg.mxu0
        %v1309 = vadd.f32 %v1276, %v1307
        %v1310 = vsel %vm679, %v1309, 0.0
        %1311 = vadd.xlane.f32.xlu0 %v1310
        %v1312 = vpop.xlane.xlu0 %1311
        %v1313 = vrot.slane %v1312, 4
        %v1314 = vadd.f32 %v1312, %v1313
        %v1315 = vrot.slane %v1314, 2
        %v1316 = vadd.f32 %v1314, %v1315
        %v1317 = vrot.slane %v1316, 1
        %v1318 = vadd.f32 %v1316, %v1317
        %v1319 = vmul.f32 %v1318, 0.0078125
        %v1320 = vsub.f32 %v1309, %v1319
        %v1321 = vmul.f32 %v1320, %v1320
        %v1322 = vsel %vm679, %v1321, 0.0
        %1323 = vadd.xlane.f32.xlu0 %v1322
        %v1324 = vpop.xlane.xlu0 %1323
        %v1325 = vrot.slane %v1324, 4
        %v1326 = vadd.f32 %v1324, %v1325
        %v1327 = vrot.slane %v1326, 2
        %v1328 = vadd.f32 %v1326, %v1327
        %v1329 = vrot.slane %v1328, 1
        %v1330 = vadd.f32 %v1328, %v1329
        %v1331 = vmul.f32 %v1330, 0.0078125
        %v1332 = vadd.f32 %v1331, 1e-05
        %v1333 = vrsqrt.pop %v1332
        %v1334 = vmul.f32 %v1333, %v1332
        %v1335 = vmul.f32 %v1334, %v1333
        %v1336 = vmul.f32 0.5, %v1335
        %v1337 = vsub.f32 1.5, %v1336
        %v1338 = vmul.f32 %v1333, %v1337
        %vm1339 = vweird.f32 %v1332
        %vm1340 = vweird.f32 %v1333
        %vm1341 = vmor %vm1339, %vm1340
        %v1342 = vsel %vm1341, %v1333, %v1338
        %v1343 = vmul.f32 %v1320, %v1342
        %v1344 = vld [vmem:[%s11] sm:$0xff]
        %1346 = vset.pattern.permute.xlu0 0
        %1347 = vperm.xlu0 %1346, %v1344
        %v1348 = vpop.permute.xlu0 %1347
        %v1350 = vmul.f32 %v1343, %v1348
        %v1351 = vld [vmem:[%s12] sm:$0xff]
        %1353 = vset.pattern.permute.xlu0 0
        %1354 = vperm.xlu0 %1353, %v1351
        %v1355 = vpop.permute.xlu0 %1354
        %v1357 = vadd.f32 %v1350, %v1355
        %v1358 = vmul.f32 %v1357, 0.5
        %v1359 = vmul.f32 %v1357, 0.70710677
        %v1360 = vand.u32 2147483647, %v1359
        %v1361 = vmul.f32 %v1360, 0.3275911
        %v1362 = vadd.f32 %v1361, 1.0
        %v1363 = vrcp.pop %v1362
        %v1364 = vmul.f32 %v1362, %v1363
        %v1365 = vsub.f32 1.0, %v1364
        %v1366 = vmul.f32 %v1363, %v1365
        %v1367 = vadd.f32 %v1363, %v1366
        %vm1368 = vweird.f32 %v1362
        %vm1369 = vweird.f32 %v1363
        %vm1370 = vmor %vm1368, %vm1369
        %v1371 = vsel %vm1370, %v1363, %v1367
        %v1372 = vand.u32 2147483647, %v1362
        %vm1373 = vcmp.eq.f32.partialorder %v1372, 8.507059e+37
        %v1374 = vand.u32 %v1362, 2147483648
        %v1375 = vor.u32 1.1754944e-38, %v1374
        %v1376 = vsel %vm1373, %v1375, %v1371
        %v1377 = vmul.f32 1.0, %v1376
        %v1378 = vmul.f32 %v1377, 1.0614054
        %v1379 = vadd.f32 %v1378, -1.4531521
        %v1380 = vmul.f32 %v1379, %v1377
        %v1381 = vadd.f32 %v1380, 1.4214138
        %v1382 = vmul.f32 %v1381, %v1377
        %v1383 = vadd.f32 %v1382, -0.28449672
        %v1384 = vmul.f32 %v1383, %v1377
        %v1385 = vadd.f32 %v1384, 0.2548296
        %v1386 = vmul.f32 %v1385, %v1377
        %v1387 = vmul.f32 %v1360, %v1360
        %v1388 = vsub.f32 0.0, %v1387
        %v1389 = vmul.f32 %v1388, 1.442695
        %v1390 = vpow.pop %v1389
        %v1391 = vmul.f32 %v1386, %v1390
        %v1392 = vsub.f32 1.0, %v1391
        %vm1393 = vcmp.lt.f32.partialorder %v1359, 0.0
        %v1394 = vsub.f32 0.0, %v1392
        %v1395 = vsel %vm1393, %v1394, %v1392
        %v1396 = vadd.f32 %v1395, 1.0
        %v1397 = vmul.f32 %v1358, %v1396
        %1399 = vrot.lane.b32.xlu0 %v1397, 1
        %v1400 = vpop.permute.xlu0 %1399
        %v1402 = vsel %vm660, 0.0, %v1400
        %v1403 = vsel %vm663, %v1402, 0.0
        %v1404 = vld [vmem:[%s13] sm:$0xff]
        %s1405 = scalar_lea.vmem %s13, 8
        %v1406 = vld [vmem:[%s1405] sm:$0xff]
        %1408 = vrot.lane.b32.xlu0 %v1403, 127
        %v1409 = vpop.permute.xlu0 %1408
        %v1412 = vsel %vm627, %v1406, 0
        %1414 = vmatpush.msra.mxu0 0.0
        %1415 = vmatpush.msra.mxu0 0.0
        %1416 = vmatpush.msra.mxu0 0.0
        %1417 = vmatpush.msra.mxu0 0.0
        %1418 = vmatpush.msra.mxu0 0.0
        %1419 = vmatpush.msra.mxu0 0.0
        %1420 = vmatpush.msra.mxu0 0.0
        %1421 = vmatpush.msra.mxu0 0.0
        %1422 = vmatpush.msra.mxu0 0.0
        %1423 = vmatpush.msra.mxu0 0.0
        %1424 = vmatpush.msra.mxu0 0.0
        %1425 = vmatpush.msra.mxu0 0.0
        %1426 = vmatpush.msra.mxu0 0.0
        %1427 = vmatpush.msra.mxu0 0.0
        %1428 = vmatpush.msra.mxu0 0.0
        %1429 = vmatpush.msra.mxu0 %v1409
        %1430 = vmatmul.f32.gmra.mxu0 %v1412
        %v1431 = vpop.f32.mrf.mxu0
        %v1432 = vadd.f32 0.0, %v1431
        %1433 = vdwg.mxu0
        %v1435 = vsel %vm627, %v1404, 0
        %1437 = vmatpush.msra.mxu0 0.0
        %1438 = vmatpush.msra.mxu0 0.0
        %1439 = vmatpush.msra.mxu0 0.0
        %1440 = vmatpush.msra.mxu0 0.0
        %1441 = vmatpush.msra.mxu0 0.0
        %1442 = vmatpush.msra.mxu0 0.0
        %1443 = vmatpush.msra.mxu0 0.0
        %1444 = vmatpush.msra.mxu0 0.0
        %1445 = vmatpush.msra.mxu0 0.0
        %1446 = vmatpush.msra.mxu0 0.0
        %1447 = vmatpush.msra.mxu0 0.0
        %1448 = vmatpush.msra.mxu0 0.0
        %1449 = vmatpush.msra.mxu0 0.0
        %1450 = vmatpush.msra.mxu0 0.0
        %1451 = vmatpush.msra.mxu0 0.0
        %1452 = vmatpush.msra.mxu0 %v1403
        %1453 = vmatmul.f32.gmra.mxu0 %v1435
        %v1454 = vpop.f32.mrf.mxu0
        %v1455 = vadd.f32 %v1432, %v1454
        %1456 = vdwg.mxu0
        %s1457 = scalar_lea.vmem %s13, 16
        %v1458 = vld [vmem:[%s1457] sm:$0xff]
        %1459 = vrot.lane.b32.xlu0 %v1403, 126
        %v1460 = vpop.permute.xlu0 %1459
        %v1463 = vsel %vm627, %v1458, 0
        %1465 = vmatpush.msra.mxu0 0.0
        %1466 = vmatpush.msra.mxu0 0.0
        %1467 = vmatpush.msra.mxu0 0.0
        %1468 = vmatpush.msra.mxu0 0.0
        %1469 = vmatpush.msra.mxu0 0.0
        %1470 = vmatpush.msra.mxu0 0.0
        %1471 = vmatpush.msra.mxu0 0.0
        %1472 = vmatpush.msra.mxu0 0.0
        %1473 = vmatpush.msra.mxu0 0.0
        %1474 = vmatpush.msra.mxu0 0.0
        %1475 = vmatpush.msra.mxu0 0.0
        %1476 = vmatpush.msra.mxu0 0.0
        %1477 = vmatpush.msra.mxu0 0.0
        %1478 = vmatpush.msra.mxu0 0.0
        %1479 = vmatpush.msra.mxu0 0.0
        %1480 = vmatpush.msra.mxu0 %v1460
        %1481 = vmatmul.f32.gmra.mxu0 %v1463
        %v1482 = vpop.f32.mrf.mxu0
        %v1483 = vadd.f32 0.0, %v1482
        %1484 = vdwg.mxu0
        %v1485 = vadd.f32 %v1455, %v1483
        %v1486 = vsel %vm679, %v1485, 0.0
        %1487 = vadd.xlane.f32.xlu0 %v1486
        %v1488 = vpop.xlane.xlu0 %1487
        %v1489 = vrot.slane %v1488, 4
        %v1490 = vadd.f32 %v1488, %v1489
        %v1491 = vrot.slane %v1490, 2
        %v1492 = vadd.f32 %v1490, %v1491
        %v1493 = vrot.slane %v1492, 1
        %v1494 = vadd.f32 %v1492, %v1493
        %v1495 = vmul.f32 %v1494, 0.0078125
        %v1496 = vsub.f32 %v1485, %v1495
        %v1497 = vmul.f32 %v1496, %v1496
        %v1498 = vsel %vm679, %v1497, 0.0
        %1499 = vadd.xlane.f32.xlu0 %v1498
        %v1500 = vpop.xlane.xlu0 %1499
        %v1501 = vrot.slane %v1500, 4
        %v1502 = vadd.f32 %v1500, %v1501
        %v1503 = vrot.slane %v1502, 2
        %v1504 = vadd.f32 %v1502, %v1503
        %v1505 = vrot.slane %v1504, 1
        %v1506 = vadd.f32 %v1504, %v1505
        %v1507 = vmul.f32 %v1506, 0.0078125
        %v1508 = vadd.f32 %v1507, 1e-05
        %v1509 = vrsqrt.pop %v1508
        %v1510 = vmul.f32 %v1509, %v1508
        %v1511 = vmul.f32 %v1510, %v1509
        %v1512 = vmul.f32 0.5, %v1511
        %v1513 = vsub.f32 1.5, %v1512
        %v1514 = vmul.f32 %v1509, %v1513
        %vm1515 = vweird.f32 %v1508
        %vm1516 = vweird.f32 %v1509
        %vm1517 = vmor %vm1515, %vm1516
        %v1518 = vsel %vm1517, %v1509, %v1514
        %v1519 = vmul.f32 %v1496, %v1518
        %v1520 = vld [vmem:[%s14] sm:$0xff]
        %1522 = vset.pattern.permute.xlu0 0
        %1523 = vperm.xlu0 %1522, %v1520
        %v1524 = vpop.permute.xlu0 %1523
        %v1526 = vmul.f32 %v1519, %v1524
        %v1527 = vld [vmem:[%s15] sm:$0xff]
        %1529 = vset.pattern.permute.xlu0 0
        %1530 = vperm.xlu0 %1529, %v1527
        %v1531 = vpop.permute.xlu0 %1530
        %v1533 = vadd.f32 %v1526, %v1531
        %v1534 = vld [vmem:[%s16] sm:$0xff]
        %v1535 = vld [vmem:[%s624] sm:$0xff]
        %v1536 = vld [vmem:[%s624 + $0x8] sm:$0xff]
        %v1537 = vld [vmem:[%s624 + $0x10] sm:$0xff]
        %v1538 = vld [vmem:[%s624 + $0x18] sm:$0xff]
        %v1539 = vsub.f32 0.0, %v1535
        %v1540 = vsub.f32 0.0, %v1536
        %v1541 = vsub.f32 0.0, %v1537
        %v1542 = vsub.f32 0.0, %v1538
        %v1543 = vmul.f32 %v1539, 1.442695
        %v1544 = vpow.pop %v1543
        %v1545 = vmul.f32 %v1540, 1.442695
        %v1546 = vpow.pop %v1545
        %v1547 = vmul.f32 %v1541, 1.442695
        %v1548 = vpow.pop %v1547
        %v1549 = vmul.f32 %v1542, 1.442695
        %v1550 = vpow.pop %v1549
        %v1551 = vadd.f32 %v1544, 1.0
        %v1552 = vadd.f32 %v1546, 1.0
        %v1553 = vadd.f32 %v1548, 1.0
        %v1554 = vadd.f32 %v1550, 1.0
        %v1555 = vrcp.pop %v1551
        %v1556 = vmul.f32 %v1551, %v1555
        %v1557 = vsub.f32 1.0, %v1556
        %v1558 = vmul.f32 %v1555, %v1557
        %v1559 = vadd.f32 %v1555, %v1558
        %vm1560 = vweird.f32 %v1551
        %vm1561 = vweird.f32 %v1555
        %vm1562 = vmor %vm1560, %vm1561
        %v1563 = vsel %vm1562, %v1555, %v1559
        %v1564 = vand.u32 2147483647, %v1551
        %vm1565 = vcmp.eq.f32.partialorder %v1564, 8.507059e+37
        %v1566 = vand.u32 %v1551, 2147483648
        %v1567 = vor.u32 1.1754944e-38, %v1566
        %v1568 = vsel %vm1565, %v1567, %v1563
        %v1569 = vmul.f32 1.0, %v1568
        %v1570 = vrcp.pop %v1552
        %v1571 = vmul.f32 %v1552, %v1570
        %v1572 = vsub.f32 1.0, %v1571
        %v1573 = vmul.f32 %v1570, %v1572
        %v1574 = vadd.f32 %v1570, %v1573
        %vm1575 = vweird.f32 %v1552
        %vm1576 = vweird.f32 %v1570
        %vm1577 = vmor %vm1575, %vm1576
        %v1578 = vsel %vm1577, %v1570, %v1574
        %v1579 = vand.u32 2147483647, %v1552
        %vm1580 = vcmp.eq.f32.partialorder %v1579, 8.507059e+37
        %v1581 = vand.u32 %v1552, 2147483648
        %v1582 = vor.u32 1.1754944e-38, %v1581
        %v1583 = vsel %vm1580, %v1582, %v1578
        %v1584 = vmul.f32 1.0, %v1583
        %v1585 = vrcp.pop %v1553
        %v1586 = vmul.f32 %v1553, %v1585
        %v1587 = vsub.f32 1.0, %v1586
        %v1588 = vmul.f32 %v1585, %v1587
        %v1589 = vadd.f32 %v1585, %v1588
        %vm1590 = vweird.f32 %v1553
        %vm1591 = vweird.f32 %v1585
        %vm1592 = vmor %vm1590, %vm1591
        %v1593 = vsel %vm1592, %v1585, %v1589
        %v1594 = vand.u32 2147483647, %v1553
        %vm1595 = vcmp.eq.f32.partialorder %v1594, 8.507059e+37
        %v1596 = vand.u32 %v1553, 2147483648
        %v1597 = vor.u32 1.1754944e-38, %v1596
        %v1598 = vsel %vm1595, %v1597, %v1593
        %v1599 = vmul.f32 1.0, %v1598
        %v1600 = vrcp.pop %v1554
        %v1601 = vmul.f32 %v1554, %v1600
        %v1602 = vsub.f32 1.0, %v1601
        %v1603 = vmul.f32 %v1600, %v1602
        %v1604 = vadd.f32 %v1600, %v1603
        %vm1605 = vweird.f32 %v1554
        %vm1606 = vweird.f32 %v1600
        %vm1607 = vmor %vm1605, %vm1606
        %v1608 = vsel %vm1607, %v1600, %v1604
        %v1609 = vand.u32 2147483647, %v1554
        %vm1610 = vcmp.eq.f32.partialorder %v1609, 8.507059e+37
        %v1611 = vand.u32 %v1554, 2147483648
        %v1612 = vor.u32 1.1754944e-38, %v1611
        %v1613 = vsel %vm1610, %v1612, %v1608
        %v1614 = vmul.f32 1.0, %v1613
        %v1615 = vmul.f32 %v1535, %v1569
        %v1616 = vmul.f32 %v1536, %v1584
        %v1617 = vmul.f32 %v1537, %v1599
        %v1618 = vmul.f32 %v1538, %v1614
        %v1619 = vld [vmem:[%s17] sm:$0xff]
        %vm1620 = vcmask 261120
        %v1622 = vsel %vm1620, %v1534, 0
        %1624 = vmatpush.msra.mxu0 0.0
        %1625 = vmatpush.msra.mxu0 0.0
        %1626 = vmatpush.msra.mxu0 0.0
        %1627 = vmatpush.msra.mxu0 0.0
        %1628 = vmatpush.msra.mxu0 0.0
        %1629 = vmatpush.msra.mxu0 0.0
        %1630 = vmatpush.msra.mxu0 0.0
        %1631 = vmatpush.msra.mxu0 0.0
        %1632 = vmatpush.msra.mxu0 0.0
        %1633 = vmatpush.msra.mxu0 0.0
        %1634 = vmatpush.msra.mxu0 0.0
        %1635 = vmatpush.msra.mxu0 0.0
        %1636 = vmatpush.msra.mxu0 %v1618
        %1637 = vmatpush.msra.mxu0 %v1617
        %1638 = vmatpush.msra.mxu0 %v1616
        %1639 = vmatpush.msra.mxu0 %v1615
        %1640 = vmatmul.f32.gmra.mxu0 %v1622
        %v1641 = vpop.f32.mrf.mxu0
        %v1642 = vadd.f32 %v1619, %v1641
        %1643 = vdwg.mxu0
        %1645 = vset.pattern.permute.xlu0 0
        %1646 = vperm.xlu0 %1645, %v1642
        %v1647 = vpop.permute.xlu0 %1646
        %v1649 = vadd.f32 %v1533, %v1647
        %1650 = vst.msk [vmem:[%s611] sm:$0xff] %vm679, %v1649
        %s1651 = sand.u32 %s434, 1
        %s1652 = scalar_lea.sflag [#allocation4], %s1651
        %s1653 = sand.u32 %s434, 1
        %s1654 = smul.addr %s1653, 8
        %s1655 = scalar_lea.vmem [#allocation5], %s1654
        // Predicated region
        $region97: #{tpu_custom_call.1} parent=91 // pred_check
          %p1656 = pneg %p444
        $region98: #{tpu_custom_call.1} parent=91 // pred_check_branch
          %1658 = sbr.rel (%p1656) target = $region100
        $region99: #{tpu_custom_call.1} parent=91 // pred_region
          %1660 = vsyncadd %s1652, 0
          %s1661 = smul.addr %s33, 8
          %s1662 = scalar_lea.hbm %s18, %s1661
          %s1664 = sshll.u32 %s1655, 4
          %s1665 = int_to_ptr.vmem [resolvable:$true] %s1664
          %s1666 = sshll.u32 %s1662, 4
          %s1667 = int_to_ptr.hbm [resolvable:$true] %s1666
          %1669 = dma.vmem_to_hbm [thread:$0]  %s1665, 128, %s1667, %s1652
        $region100: #{tpu_custom_call.1} parent=91 // pred_fallthru
          _
      $region92: #{tpu_custom_call.1} parent=5 // pred_fallthru
        _
      %p1670 = scmp.le.s32.totalorder 2, %s28
      // Predicated region
      $region101: #{tpu_custom_call.1} parent=5 // pred_check
        %p1671 = pneg %p1670
      $region102: #{tpu_custom_call.1} parent=5 // pred_check_branch
        %1673 = sbr.rel (%p1671) target = $region104
      $region103: #{tpu_custom_call.1} parent=5 // pred_region
        %s1674 = ssub.s32 %s28, 2
        // Predicated region
        $region105: #{tpu_custom_call.1} parent=103 // pred_check
          %p1675 = pneg %p450
        $region106: #{tpu_custom_call.1} parent=103 // pred_check_branch
          %1677 = sbr.rel (%p1675) target = $region108
        $region107: #{tpu_custom_call.1} parent=103 // pred_region
          %s1678 = sand.u32 %s435, 1
          %s1679 = scalar_lea.sflag [#allocation4], %s1678
          %s1680 = sand.u32 %s435, 1
          %s1681 = smul.addr %s1680, 8
          %s1682 = scalar_lea.vmem [#allocation5], %s1681
          %1684 = dma.done %s1679, 128
        $region108: #{tpu_custom_call.1} parent=103 // pred_fallthru
          _
      $region104: #{tpu_custom_call.1} parent=5 // pred_fallthru
        _
    $region6: #{tpu_custom_call.1} parent=1 // loop_footer
      %s32 = sadd.s32 1, %s28
    $region7: #{tpu_custom_call.1} parent=1 // loop_footer_branch
      %27 = sbr.rel target = $region3
    $region8: #{tpu_custom_call.1} parent=1 // loop_exit
      _
    %1685 = vsyncpa [#allocation3], 1
    %s1686 = scalar_lea.sflag [#allocation3], 1
    %1687 = vsyncpa %s1686, 1
    %1688 = vsyncpa [#allocation4], 1
    %s1689 = scalar_lea.sflag [#allocation4], 1
    %1690 = vsyncpa %s1689, 1

</llo_original>
